<compile_context>
chip_gen: v6e
topology: v6e:2x2x1
jax: 0.10.0
libtpu: 0.0.40
codegen_flags: <defaults>
</compile_context>

<pallas_src>
import functools

import jax
import jax.numpy as jnp
import numpy as np
from jax.experimental import pallas as pl
from jax.experimental.pallas import tpu as pltpu

BN_EPS = 1e-5


def _vmem():
    return pl.BlockSpec(memory_space=pltpu.MemorySpace.VMEM)


def _softplus(v):
    # numerically stable softplus, matches torch.nn.functional.softplus
    return jnp.maximum(v, 0.0) + jnp.log1p(jnp.exp(-jnp.abs(v)))


# ---------------------------------------------------------------------------
# Fused Pallas kernel: rdf DistLayer + bdf DistLayer + final Linear+ReLU
# ---------------------------------------------------------------------------
def fused_module_kernel(n_data, n_nbr, n_ae,
                        x_ref, g_ref,
                        af_r, np_r, w1a_r, w1n_r, b1_r, g1_r, be1_r, g2_r, be2_r,
                        af_b, np_b, w1a_b, w1n_b, b1_b, g1_b, be1_b, g2_b, be2_b,
                        wo_ref, bo_ref, out_ref):
    c = 2 * n_ae            # BN2 / residual / module-output width
    c2 = 4 * n_ae           # fc1 output width
    rows = n_nbr * n_data
    x = x_ref[...]          # [n_data, c]
    g = g_ref[...]          # [n_nbr*n_data, n_grp] one-hot gather (nbr-major rows)

    def dist_core(af_ref, np_ref, w1a_ref, w1n_ref, b1_ref, g1_ref, be1_ref,
                  g2_ref, be2_ref):
        # ---- fc1 split by rows of W1 (atom side / neighbor side), single N=c2 matmuls ----
        ya = jnp.dot(af_ref[...], w1a_ref[...],
                     preferred_element_type=jnp.float32) + b1_ref[...]      # [n_data, c2]
        ynp = jnp.dot(np_ref[...], w1n_ref[...],
                      preferred_element_type=jnp.float32)                   # [n_grp, c2]
        # expand pooled-group projections to (nbr, data) rows: one-hot MXU gather
        yn = jnp.dot(g, ynp, preferred_element_type=jnp.float32)            # [rows, c2]

        def hh_block(j):
            # fc1 pre-activation for neighbor slot j (recomputed per pass; one cheap add)
            return yn[j * n_data:(j + 1) * n_data, :] + ya                  # [n_data, c2]

        # ---- BN1: training-mode batch stats over ALL n_data*n_nbr rows (centered 2-pass) ----
        ssum = jnp.zeros((1, c2), jnp.float32)
        for j in range(n_nbr):
            ssum = ssum + jnp.sum(hh_block(j), axis=0, keepdims=True)
        mu1 = ssum / rows
        vsum = jnp.zeros((1, c2), jnp.float32)
        for j in range(n_nbr):
            d = hh_block(j) - mu1
            vsum = vsum + jnp.sum(d * d, axis=0, keepdims=True)
        var1 = vsum / rows
        scale1 = jax.lax.rsqrt(var1 + BN_EPS) * g1_ref[...]
        shift1 = be1_ref[...] - mu1 * scale1

        # ---- relu(BN1), softmax(h1)*softplus(h2), sum over neighbors (block accumulation) ----
        acc = jnp.zeros((n_data, c), jnp.float32)
        for j in range(n_nbr):
            hr = jnp.maximum(hh_block(j) * scale1 + shift1, 0.0)            # [n_data, c2]
            h1 = hr[:, :c]                                                  # static lane slices
            h2 = hr[:, c:]
            m = jnp.max(h1, axis=1, keepdims=True)
            e = jnp.exp(h1 - m)
            p = e * pl.reciprocal(jnp.sum(e, axis=1, keepdims=True), approx=True)
            acc = acc + p * _softplus(h2)

        # ---- BN2 + residual + relu ----
        mu2 = jnp.sum(acc, axis=0, keepdims=True) / n_data
        dv = acc - mu2
        var2 = jnp.sum(dv * dv, axis=0, keepdims=True) / n_data
        s = dv * jax.lax.rsqrt(var2 + BN_EPS) * g2_ref[...] + be2_ref[...]
        return jnp.maximum(s + x, 0.0)                                      # [n_data, c]

    x1 = dist_core(af_r, np_r, w1a_r, w1n_r, b1_r, g1_r, be1_r, g2_r, be2_r)
    x2 = dist_core(af_b, np_b, w1a_b, w1n_b, b1_b, g1_b, be1_b, g2_b, be2_b)

    # Final Linear(cat([x1, x2])) + ReLU, fused while x1/x2 are still in VMEM.
    # W_out is split row-wise over the [x1 | x2] concat (exactly equivalent), avoiding an
    # in-kernel lane-offset concat of the two c-wide halves.
    wo = wo_ref[...]                                                        # [2c, c]
    y = (jnp.dot(x1, wo[:c, :], preferred_element_type=jnp.float32)
         + jnp.dot(x2, wo[c:, :], preferred_element_type=jnp.float32)
         + bo_ref[...])
    out_ref[...] = jnp.maximum(y, 0.0)


# ---------------------------------------------------------------------------
# Wrappers (data-dependent segment-max pooling stays as plain-JAX glue)
# ---------------------------------------------------------------------------
def _segmax(feat, idx, num_segments):
    return jax.ops.segment_max(feat, idx, num_segments=num_segments)


def _prep_dist_inputs(p, x, dist_feat, atom_idx, ele_idx, *, n_ae, n_ele, n_atom_groups):
    ele_pool = _segmax(x[:, n_ae:], ele_idx, n_ele)
    atom_feat = jnp.concatenate([x[:, :n_ae], ele_pool[ele_idx, :], dist_feat], axis=1)
    nbr_pool = _segmax(atom_feat, atom_idx, n_atom_groups)
    f_atom = atom_feat.shape[1]
    w1 = p["w1"]
    return (atom_feat, nbr_pool, w1[:f_atom, :], w1[f_atom:, :],
            p["b1"], p["g1"], p["be1"], p["g2"], p["be2"])


def module_dist_layers_pallas(params, x, rdf_feat, bdf_feat, atom_idx, ele_idx,
                              nbr_idx, *, n_ae, n_ele, n_atom_groups):
    n_data, n_nbr = nbr_idx.shape
    c = 2 * n_ae

    # One-hot neighbor-gather matrix, nbr-major rows: G[j*n_data + d, a] = (nbr_idx[d, j] == a).
    nbr_t = jnp.transpose(nbr_idx).reshape(-1)
    gmat = (nbr_t[:, None] ==
            jnp.arange(n_atom_groups, dtype=nbr_t.dtype)[None, :]).astype(jnp.float32)

    args_r = _prep_dist_inputs(params["rdf"], x, rdf_feat, atom_idx, ele_idx,
                               n_ae=n_ae, n_ele=n_ele, n_atom_groups=n_atom_groups)
    args_b = _prep_dist_inputs(params["bdf"], x, bdf_feat, atom_idx, ele_idx,
                               n_ae=n_ae, n_ele=n_ele, n_atom_groups=n_atom_groups)

    kernel = functools.partial(fused_module_kernel, n_data, n_nbr, n_ae)
    n_in = 2 + len(args_r) + len(args_b) + 2
    return pl.pallas_call(
        kernel,
        out_shape=jax.ShapeDtypeStruct((n_data, c), jnp.float32),
        in_specs=[_vmem()] * n_in,
        out_specs=_vmem(),
    )(x, gmat, *args_r, *args_b, params["w_out"], params["b_out"])


# ---------------------------------------------------------------------------
# Pure-JAX reference (direct transcription of the torch math) for verification
# ---------------------------------------------------------------------------
def _bn_train(v, g, b):
    mu = jnp.mean(v, axis=0, keepdims=True)
    var = jnp.mean(jnp.square(v - mu), axis=0, keepdims=True)
    return (v - mu) * jax.lax.rsqrt(var + BN_EPS) * g + b


def dist_layer_ref(p, x, dist_feat, atom_idx, ele_idx, nbr_idx, *, n_ae, n_ele, n_atom_groups):
    n_data, n_nbr = nbr_idx.shape
    ele_pool = _segmax(x[:, n_ae:], ele_idx, n_ele)
    atom_feat = jnp.concatenate([x[:, :n_ae], ele_pool[ele_idx, :], dist_feat], axis=1)
    nbr_pool = _segmax(atom_feat, atom_idx, n_atom_groups)
    nbr_feat = nbr_pool[nbr_idx]
    f_atom = atom_feat.shape[1]
    h = jnp.concatenate(
        [jnp.broadcast_to(atom_feat[:, None, :], (n_data, n_nbr, f_atom)), nbr_feat],
        axis=2).reshape(n_data * n_nbr, 2 * f_atom)
    c = 2 * n_ae
    hh = _bn_train(h @ p["w1"] + p["b1"], p["g1"], p["be1"])
    hh = jnp.maximum(hh, 0.0).reshape(n_data, n_nbr, 2 * c)
    h1, h2 = hh[:, :, :c], hh[:, :, c:]
    pm = jax.nn.softmax(h1, axis=2)
    sp = jnp.maximum(h2, 0.0) + jnp.log1p(jnp.exp(-jnp.abs(h2)))
    s = jnp.sum(pm * sp, axis=1)
    return jnp.maximum(_bn_train(s, p["g2"], p["be2"]) + x, 0.0)


def module_dist_layers_ref(params, x, rdf_feat, bdf_feat, atom_idx, ele_idx, nbr_idx,
                           *, n_ae, n_ele, n_atom_groups):
    x1 = dist_layer_ref(params["rdf"], x, rdf_feat, atom_idx, ele_idx, nbr_idx,
                        n_ae=n_ae, n_ele=n_ele, n_atom_groups=n_atom_groups)
    x2 = dist_layer_ref(params["bdf"], x, bdf_feat, atom_idx, ele_idx, nbr_idx,
                        n_ae=n_ae, n_ele=n_ele, n_atom_groups=n_atom_groups)
    cat = jnp.concatenate([x1, x2], axis=1)
    return jnp.maximum(cat @ params["w_out"] + params["b_out"], 0.0)


# ---------------------------------------------------------------------------
# Deterministic parameter init (synthetic; not a checkpoint load)
# ---------------------------------------------------------------------------
def init_dist_layer_params(key, n_de, n_ae):
    f_in = n_ae * 4 + n_de * 2
    f_out = n_ae * 4
    k = jax.random.split(key, 6)
    return {
        "w1": 0.1 * jax.random.normal(k[0], (f_in, f_out), jnp.float32),
        "b1": 0.05 * jax.random.normal(k[1], (1, f_out), jnp.float32),
        "g1": 1.0 + 0.1 * jax.random.normal(k[2], (1, f_out), jnp.float32),
        "be1": 0.1 * jax.random.normal(k[3], (1, f_out), jnp.float32),
        "g2": 1.0 + 0.1 * jax.random.normal(k[4], (1, 2 * n_ae), jnp.float32),
        "be2": 0.1 * jax.random.normal(k[5], (1, 2 * n_ae), jnp.float32),
    }


def init_module_params(key, n_ae, n_re, n_be):
    k = jax.random.split(key, 4)
    return {
        "rdf": init_dist_layer_params(k[0], n_re, n_ae),
        "bdf": init_dist_layer_params(k[1], n_be, n_ae),
        "w_out": 0.1 * jax.random.normal(k[2], (4 * n_ae, 2 * n_ae), jnp.float32),
        "b_out": 0.05 * jax.random.normal(k[3], (1, 2 * n_ae), jnp.float32),
    }


# ---------------------------------------------------------------------------
if __name__ == "__main__":
    n_ae, n_re, n_be = 16, 8, 8
    n_data, n_nbr = 8, 4
    n_ele, n_atom_groups = 3, 4

    root = jax.random.PRNGKey(0)
    kp, kx, kr, kb, kn = jax.random.split(root, 5)

    params = init_module_params(kp, n_ae, n_re, n_be)

    x = jax.random.normal(kx, (n_data, 2 * n_ae), jnp.float32)
    rdf_feat = jax.random.normal(kr, (n_data, n_re), jnp.float32)
    bdf_feat = jax.random.normal(kb, (n_data, n_be), jnp.float32)
    ele_idx = jnp.array([0, 0, 1, 1, 2, 2, 0, 1], dtype=jnp.int32)
    atom_idx = jnp.array([0, 0, 1, 1, 2, 2, 3, 3], dtype=jnp.int32)
    nbr_idx = jax.random.randint(kn, (n_data, n_nbr), 0, n_atom_groups, dtype=jnp.int32)

    out = module_dist_layers_pallas(
        params, x, rdf_feat, bdf_feat, atom_idx, ele_idx, nbr_idx,
        n_ae=n_ae, n_ele=n_ele, n_atom_groups=n_atom_groups)
    out = jax.block_until_ready(out)

    ref = module_dist_layers_ref(
        params, x, rdf_feat, bdf_feat, atom_idx, ele_idx, nbr_idx,
        n_ae=n_ae, n_ele=n_ele, n_atom_groups=n_atom_groups)
    ref = jax.block_until_ready(ref)

    assert out.shape == (n_data, 2 * n_ae)
    np.testing.assert_allclose(np.asarray(out), np.asarray(ref), rtol=1e-2, atol=1e-2)
    print("KERNEL_OK")
</pallas_src>

<mosaic_0001>
module attributes {stable_mosaic.version = 11 : i64} {
  func.func @fused_module_kernel(%arg0: memref<8x32xf32, #tpu.memory_space<vmem>>, %arg1: memref<32x4xf32, #tpu.memory_space<vmem>>, %arg2: memref<8x40xf32, #tpu.memory_space<vmem>>, %arg3: memref<4x40xf32, #tpu.memory_space<vmem>>, %arg4: memref<40x64xf32, #tpu.memory_space<vmem>>, %arg5: memref<40x64xf32, #tpu.memory_space<vmem>>, %arg6: memref<1x64xf32, #tpu.memory_space<vmem>>, %arg7: memref<1x64xf32, #tpu.memory_space<vmem>>, %arg8: memref<1x64xf32, #tpu.memory_space<vmem>>, %arg9: memref<1x32xf32, #tpu.memory_space<vmem>>, %arg10: memref<1x32xf32, #tpu.memory_space<vmem>>, %arg11: memref<8x40xf32, #tpu.memory_space<vmem>>, %arg12: memref<4x40xf32, #tpu.memory_space<vmem>>, %arg13: memref<40x64xf32, #tpu.memory_space<vmem>>, %arg14: memref<40x64xf32, #tpu.memory_space<vmem>>, %arg15: memref<1x64xf32, #tpu.memory_space<vmem>>, %arg16: memref<1x64xf32, #tpu.memory_space<vmem>>, %arg17: memref<1x64xf32, #tpu.memory_space<vmem>>, %arg18: memref<1x32xf32, #tpu.memory_space<vmem>>, %arg19: memref<1x32xf32, #tpu.memory_space<vmem>>, %arg20: memref<64x32xf32, #tpu.memory_space<vmem>>, %arg21: memref<1x32xf32, #tpu.memory_space<vmem>>, %arg22: memref<8x32xf32, #tpu.memory_space<vmem>>) attributes {dimension_semantics = [], scalar_prefetch = 0 : i64, scratch_operands = 0 : i64, tpu.core_type = #tpu.core_type<tc>} {
    %c0 = arith.constant 0 : index
    %c0_0 = arith.constant 0 : index
    %0 = vector.load %arg0[%c0, %c0_0] : memref<8x32xf32, #tpu.memory_space<vmem>>, vector<8x32xf32>
    %c0_1 = arith.constant 0 : index
    %c0_2 = arith.constant 0 : index
    %1 = vector.load %arg1[%c0_1, %c0_2] : memref<32x4xf32, #tpu.memory_space<vmem>>, vector<32x4xf32>
    %c0_3 = arith.constant 0 : index
    %c0_4 = arith.constant 0 : index
    %2 = vector.load %arg2[%c0_3, %c0_4] : memref<8x40xf32, #tpu.memory_space<vmem>>, vector<8x40xf32>
    %c0_5 = arith.constant 0 : index
    %c0_6 = arith.constant 0 : index
    %3 = vector.load %arg4[%c0_5, %c0_6] : memref<40x64xf32, #tpu.memory_space<vmem>>, vector<40x64xf32>
    %cst = arith.constant dense<0.000000e+00> : vector<8x64xf32>
    %4 = tpu.matmul %2, %3, %cst {dimension_numbers = #tpu.dot_dimension_numbers<[1], [0], [0], [1], [0, 0, 1, 1], [], []>} : vector<8x40xf32>, vector<40x64xf32>, vector<8x64xf32> -> vector<8x64xf32>
    %c0_7 = arith.constant 0 : index
    %c0_8 = arith.constant 0 : index
    %5 = vector.load %arg6[%c0_7, %c0_8] : memref<1x64xf32, #tpu.memory_space<vmem>>, vector<1x64xf32>
    %6 = vector.broadcast %5 : vector<1x64xf32> to vector<8x64xf32>
    %7 = arith.addf %4, %6 : vector<8x64xf32>
    %c0_9 = arith.constant 0 : index
    %c0_10 = arith.constant 0 : index
    %8 = vector.load %arg3[%c0_9, %c0_10] : memref<4x40xf32, #tpu.memory_space<vmem>>, vector<4x40xf32>
    %c0_11 = arith.constant 0 : index
    %c0_12 = arith.constant 0 : index
    %9 = vector.load %arg5[%c0_11, %c0_12] : memref<40x64xf32, #tpu.memory_space<vmem>>, vector<40x64xf32>
    %cst_13 = arith.constant dense<0.000000e+00> : vector<4x64xf32>
    %10 = tpu.matmul %8, %9, %cst_13 {dimension_numbers = #tpu.dot_dimension_numbers<[1], [0], [0], [1], [0, 0, 1, 1], [], []>} : vector<4x40xf32>, vector<40x64xf32>, vector<4x64xf32> -> vector<4x64xf32>
    %cst_14 = arith.constant dense<0.000000e+00> : vector<32x64xf32>
    %11 = tpu.matmul %1, %10, %cst_14 {dimension_numbers = #tpu.dot_dimension_numbers<[1], [0], [0], [1], [0, 0, 1, 1], [], []>} : vector<32x4xf32>, vector<4x64xf32>, vector<32x64xf32> -> vector<32x64xf32>
    %cst_15 = arith.constant 0.000000e+00 : f32
    %12 = vector.broadcast %cst_15 : f32 to vector<1x64xf32>
    %13 = vector.extract_strided_slice %11 {offsets = [0, 0], sizes = [8, 64], strides = [1, 1]} : vector<32x64xf32> to vector<8x64xf32>
    %14 = arith.addf %13, %7 : vector<8x64xf32>
    %cst_16 = arith.constant dense<0.000000e+00> : vector<64xf32>
    %15 = vector.multi_reduction <add>, %14, %cst_16 [0] : vector<8x64xf32> to vector<64xf32>
    %16 = vector.shape_cast %15 : vector<64xf32> to vector<1x64xf32>
    %17 = arith.addf %12, %16 : vector<1x64xf32>
    %18 = vector.extract_strided_slice %11 {offsets = [8, 0], sizes = [8, 64], strides = [1, 1]} : vector<32x64xf32> to vector<8x64xf32>
    %19 = arith.addf %18, %7 : vector<8x64xf32>
    %cst_17 = arith.constant dense<0.000000e+00> : vector<64xf32>
    %20 = vector.multi_reduction <add>, %19, %cst_17 [0] : vector<8x64xf32> to vector<64xf32>
    %21 = vector.shape_cast %20 : vector<64xf32> to vector<1x64xf32>
    %22 = arith.addf %17, %21 : vector<1x64xf32>
    %23 = vector.extract_strided_slice %11 {offsets = [16, 0], sizes = [8, 64], strides = [1, 1]} : vector<32x64xf32> to vector<8x64xf32>
    %24 = arith.addf %23, %7 : vector<8x64xf32>
    %cst_18 = arith.constant dense<0.000000e+00> : vector<64xf32>
    %25 = vector.multi_reduction <add>, %24, %cst_18 [0] : vector<8x64xf32> to vector<64xf32>
    %26 = vector.shape_cast %25 : vector<64xf32> to vector<1x64xf32>
    %27 = arith.addf %22, %26 : vector<1x64xf32>
    %28 = vector.extract_strided_slice %11 {offsets = [24, 0], sizes = [8, 64], strides = [1, 1]} : vector<32x64xf32> to vector<8x64xf32>
    %29 = arith.addf %28, %7 : vector<8x64xf32>
    %cst_19 = arith.constant dense<0.000000e+00> : vector<64xf32>
    %30 = vector.multi_reduction <add>, %29, %cst_19 [0] : vector<8x64xf32> to vector<64xf32>
    %31 = vector.shape_cast %30 : vector<64xf32> to vector<1x64xf32>
    %32 = arith.addf %27, %31 : vector<1x64xf32>
    %cst_20 = arith.constant 3.200000e+01 : f32
    %33 = vector.broadcast %cst_20 : f32 to vector<1x64xf32>
    %34 = arith.divf %32, %33 : vector<1x64xf32>
    %cst_21 = arith.constant 0.000000e+00 : f32
    %35 = vector.broadcast %cst_21 : f32 to vector<1x64xf32>
    %36 = vector.extract_strided_slice %11 {offsets = [0, 0], sizes = [8, 64], strides = [1, 1]} : vector<32x64xf32> to vector<8x64xf32>
    %37 = arith.addf %36, %7 : vector<8x64xf32>
    %38 = vector.broadcast %34 : vector<1x64xf32> to vector<8x64xf32>
    %39 = arith.subf %37, %38 : vector<8x64xf32>
    %40 = arith.mulf %39, %39 : vector<8x64xf32>
    %cst_22 = arith.constant dense<0.000000e+00> : vector<64xf32>
    %41 = vector.multi_reduction <add>, %40, %cst_22 [0] : vector<8x64xf32> to vector<64xf32>
    %42 = vector.shape_cast %41 : vector<64xf32> to vector<1x64xf32>
    %43 = arith.addf %35, %42 : vector<1x64xf32>
    %44 = vector.extract_strided_slice %11 {offsets = [8, 0], sizes = [8, 64], strides = [1, 1]} : vector<32x64xf32> to vector<8x64xf32>
    %45 = arith.addf %44, %7 : vector<8x64xf32>
    %46 = vector.broadcast %34 : vector<1x64xf32> to vector<8x64xf32>
    %47 = arith.subf %45, %46 : vector<8x64xf32>
    %48 = arith.mulf %47, %47 : vector<8x64xf32>
    %cst_23 = arith.constant dense<0.000000e+00> : vector<64xf32>
    %49 = vector.multi_reduction <add>, %48, %cst_23 [0] : vector<8x64xf32> to vector<64xf32>
    %50 = vector.shape_cast %49 : vector<64xf32> to vector<1x64xf32>
    %51 = arith.addf %43, %50 : vector<1x64xf32>
    %52 = vector.extract_strided_slice %11 {offsets = [16, 0], sizes = [8, 64], strides = [1, 1]} : vector<32x64xf32> to vector<8x64xf32>
    %53 = arith.addf %52, %7 : vector<8x64xf32>
    %54 = vector.broadcast %34 : vector<1x64xf32> to vector<8x64xf32>
    %55 = arith.subf %53, %54 : vector<8x64xf32>
    %56 = arith.mulf %55, %55 : vector<8x64xf32>
    %cst_24 = arith.constant dense<0.000000e+00> : vector<64xf32>
    %57 = vector.multi_reduction <add>, %56, %cst_24 [0] : vector<8x64xf32> to vector<64xf32>
    %58 = vector.shape_cast %57 : vector<64xf32> to vector<1x64xf32>
    %59 = arith.addf %51, %58 : vector<1x64xf32>
    %60 = vector.extract_strided_slice %11 {offsets = [24, 0], sizes = [8, 64], strides = [1, 1]} : vector<32x64xf32> to vector<8x64xf32>
    %61 = arith.addf %60, %7 : vector<8x64xf32>
    %62 = vector.broadcast %34 : vector<1x64xf32> to vector<8x64xf32>
    %63 = arith.subf %61, %62 : vector<8x64xf32>
    %64 = arith.mulf %63, %63 : vector<8x64xf32>
    %cst_25 = arith.constant dense<0.000000e+00> : vector<64xf32>
    %65 = vector.multi_reduction <add>, %64, %cst_25 [0] : vector<8x64xf32> to vector<64xf32>
    %66 = vector.shape_cast %65 : vector<64xf32> to vector<1x64xf32>
    %67 = arith.addf %59, %66 : vector<1x64xf32>
    %cst_26 = arith.constant 3.200000e+01 : f32
    %68 = vector.broadcast %cst_26 : f32 to vector<1x64xf32>
    %69 = arith.divf %67, %68 : vector<1x64xf32>
    %cst_27 = arith.constant 9.99999974E-6 : f32
    %70 = vector.broadcast %cst_27 : f32 to vector<1x64xf32>
    %71 = arith.addf %69, %70 : vector<1x64xf32>
    %72 = math.rsqrt %71 : vector<1x64xf32>
    %c0_28 = arith.constant 0 : index
    %c0_29 = arith.constant 0 : index
    %73 = vector.load %arg7[%c0_28, %c0_29] : memref<1x64xf32, #tpu.memory_space<vmem>>, vector<1x64xf32>
    %74 = arith.mulf %72, %73 : vector<1x64xf32>
    %c0_30 = arith.constant 0 : index
    %c0_31 = arith.constant 0 : index
    %75 = vector.load %arg8[%c0_30, %c0_31] : memref<1x64xf32, #tpu.memory_space<vmem>>, vector<1x64xf32>
    %76 = arith.mulf %34, %74 : vector<1x64xf32>
    %77 = arith.subf %75, %76 : vector<1x64xf32>
    %cst_32 = arith.constant 0.000000e+00 : f32
    %78 = vector.broadcast %cst_32 : f32 to vector<8x32xf32>
    %79 = vector.extract_strided_slice %11 {offsets = [0, 0], sizes = [8, 64], strides = [1, 1]} : vector<32x64xf32> to vector<8x64xf32>
    %80 = arith.addf %79, %7 : vector<8x64xf32>
    %81 = vector.broadcast %74 : vector<1x64xf32> to vector<8x64xf32>
    %82 = arith.mulf %80, %81 : vector<8x64xf32>
    %83 = vector.broadcast %77 : vector<1x64xf32> to vector<8x64xf32>
    %84 = arith.addf %82, %83 : vector<8x64xf32>
    %cst_33 = arith.constant 0.000000e+00 : f32
    %85 = vector.broadcast %cst_33 : f32 to vector<8x64xf32>
    %86 = arith.maximumf %84, %85 : vector<8x64xf32>
    %87 = vector.extract_strided_slice %86 {offsets = [0, 0], sizes = [8, 32], strides = [1, 1]} : vector<8x64xf32> to vector<8x32xf32>
    %88 = vector.extract_strided_slice %86 {offsets = [0, 32], sizes = [8, 32], strides = [1, 1]} : vector<8x64xf32> to vector<8x32xf32>
    %cst_34 = arith.constant dense<0xFF800000> : vector<8xf32>
    %89 = vector.multi_reduction <maximumf>, %87, %cst_34 [1] : vector<8x32xf32> to vector<8xf32>
    %90 = vector.shape_cast %89 : vector<8xf32> to vector<8x1xf32>
    %91 = vector.broadcast %90 : vector<8x1xf32> to vector<8x32xf32>
    %92 = arith.subf %87, %91 : vector<8x32xf32>
    %93 = math.exp %92 : vector<8x32xf32>
    %cst_35 = arith.constant dense<0.000000e+00> : vector<8xf32>
    %94 = vector.multi_reduction <add>, %93, %cst_35 [1] : vector<8x32xf32> to vector<8xf32>
    %95 = vector.shape_cast %94 : vector<8xf32> to vector<8x1xf32>
    %96 = tpu.reciprocal %95 {approx = true} : vector<8x1xf32> -> vector<8x1xf32>
    %97 = vector.broadcast %96 : vector<8x1xf32> to vector<8x32xf32>
    %98 = arith.mulf %93, %97 : vector<8x32xf32>
    %cst_36 = arith.constant 0.000000e+00 : f32
    %99 = vector.broadcast %cst_36 : f32 to vector<8x32xf32>
    %100 = arith.maximumf %88, %99 : vector<8x32xf32>
    %101 = math.absf %88 : vector<8x32xf32>
    %cst_37 = arith.constant 0.000000e+00 : f32
    %102 = vector.broadcast %cst_37 : f32 to vector<8x32xf32>
    %103 = arith.subf %102, %101 : vector<8x32xf32>
    %104 = math.exp %103 : vector<8x32xf32>
    %105 = math.log1p %104 : vector<8x32xf32>
    %106 = arith.addf %100, %105 : vector<8x32xf32>
    %107 = arith.mulf %98, %106 : vector<8x32xf32>
    %108 = arith.addf %78, %107 : vector<8x32xf32>
    %109 = vector.extract_strided_slice %11 {offsets = [8, 0], sizes = [8, 64], strides = [1, 1]} : vector<32x64xf32> to vector<8x64xf32>
    %110 = arith.addf %109, %7 : vector<8x64xf32>
    %111 = vector.broadcast %74 : vector<1x64xf32> to vector<8x64xf32>
    %112 = arith.mulf %110, %111 : vector<8x64xf32>
    %113 = vector.broadcast %77 : vector<1x64xf32> to vector<8x64xf32>
    %114 = arith.addf %112, %113 : vector<8x64xf32>
    %cst_38 = arith.constant 0.000000e+00 : f32
    %115 = vector.broadcast %cst_38 : f32 to vector<8x64xf32>
    %116 = arith.maximumf %114, %115 : vector<8x64xf32>
    %117 = vector.extract_strided_slice %116 {offsets = [0, 0], sizes = [8, 32], strides = [1, 1]} : vector<8x64xf32> to vector<8x32xf32>
    %118 = vector.extract_strided_slice %116 {offsets = [0, 32], sizes = [8, 32], strides = [1, 1]} : vector<8x64xf32> to vector<8x32xf32>
    %cst_39 = arith.constant dense<0xFF800000> : vector<8xf32>
    %119 = vector.multi_reduction <maximumf>, %117, %cst_39 [1] : vector<8x32xf32> to vector<8xf32>
    %120 = vector.shape_cast %119 : vector<8xf32> to vector<8x1xf32>
    %121 = vector.broadcast %120 : vector<8x1xf32> to vector<8x32xf32>
    %122 = arith.subf %117, %121 : vector<8x32xf32>
    %123 = math.exp %122 : vector<8x32xf32>
    %cst_40 = arith.constant dense<0.000000e+00> : vector<8xf32>
    %124 = vector.multi_reduction <add>, %123, %cst_40 [1] : vector<8x32xf32> to vector<8xf32>
    %125 = vector.shape_cast %124 : vector<8xf32> to vector<8x1xf32>
    %126 = tpu.reciprocal %125 {approx = true} : vector<8x1xf32> -> vector<8x1xf32>
    %127 = vector.broadcast %126 : vector<8x1xf32> to vector<8x32xf32>
    %128 = arith.mulf %123, %127 : vector<8x32xf32>
    %cst_41 = arith.constant 0.000000e+00 : f32
    %129 = vector.broadcast %cst_41 : f32 to vector<8x32xf32>
    %130 = arith.maximumf %118, %129 : vector<8x32xf32>
    %131 = math.absf %118 : vector<8x32xf32>
    %cst_42 = arith.constant 0.000000e+00 : f32
    %132 = vector.broadcast %cst_42 : f32 to vector<8x32xf32>
    %133 = arith.subf %132, %131 : vector<8x32xf32>
    %134 = math.exp %133 : vector<8x32xf32>
    %135 = math.log1p %134 : vector<8x32xf32>
    %136 = arith.addf %130, %135 : vector<8x32xf32>
    %137 = arith.mulf %128, %136 : vector<8x32xf32>
    %138 = arith.addf %108, %137 : vector<8x32xf32>
    %139 = vector.extract_strided_slice %11 {offsets = [16, 0], sizes = [8, 64], strides = [1, 1]} : vector<32x64xf32> to vector<8x64xf32>
    %140 = arith.addf %139, %7 : vector<8x64xf32>
    %141 = vector.broadcast %74 : vector<1x64xf32> to vector<8x64xf32>
    %142 = arith.mulf %140, %141 : vector<8x64xf32>
    %143 = vector.broadcast %77 : vector<1x64xf32> to vector<8x64xf32>
    %144 = arith.addf %142, %143 : vector<8x64xf32>
    %cst_43 = arith.constant 0.000000e+00 : f32
    %145 = vector.broadcast %cst_43 : f32 to vector<8x64xf32>
    %146 = arith.maximumf %144, %145 : vector<8x64xf32>
    %147 = vector.extract_strided_slice %146 {offsets = [0, 0], sizes = [8, 32], strides = [1, 1]} : vector<8x64xf32> to vector<8x32xf32>
    %148 = vector.extract_strided_slice %146 {offsets = [0, 32], sizes = [8, 32], strides = [1, 1]} : vector<8x64xf32> to vector<8x32xf32>
    %cst_44 = arith.constant dense<0xFF800000> : vector<8xf32>
    %149 = vector.multi_reduction <maximumf>, %147, %cst_44 [1] : vector<8x32xf32> to vector<8xf32>
    %150 = vector.shape_cast %149 : vector<8xf32> to vector<8x1xf32>
    %151 = vector.broadcast %150 : vector<8x1xf32> to vector<8x32xf32>
    %152 = arith.subf %147, %151 : vector<8x32xf32>
    %153 = math.exp %152 : vector<8x32xf32>
    %cst_45 = arith.constant dense<0.000000e+00> : vector<8xf32>
    %154 = vector.multi_reduction <add>, %153, %cst_45 [1] : vector<8x32xf32> to vector<8xf32>
    %155 = vector.shape_cast %154 : vector<8xf32> to vector<8x1xf32>
    %156 = tpu.reciprocal %155 {approx = true} : vector<8x1xf32> -> vector<8x1xf32>
    %157 = vector.broadcast %156 : vector<8x1xf32> to vector<8x32xf32>
    %158 = arith.mulf %153, %157 : vector<8x32xf32>
    %cst_46 = arith.constant 0.000000e+00 : f32
    %159 = vector.broadcast %cst_46 : f32 to vector<8x32xf32>
    %160 = arith.maximumf %148, %159 : vector<8x32xf32>
    %161 = math.absf %148 : vector<8x32xf32>
    %cst_47 = arith.constant 0.000000e+00 : f32
    %162 = vector.broadcast %cst_47 : f32 to vector<8x32xf32>
    %163 = arith.subf %162, %161 : vector<8x32xf32>
    %164 = math.exp %163 : vector<8x32xf32>
    %165 = math.log1p %164 : vector<8x32xf32>
    %166 = arith.addf %160, %165 : vector<8x32xf32>
    %167 = arith.mulf %158, %166 : vector<8x32xf32>
    %168 = arith.addf %138, %167 : vector<8x32xf32>
    %169 = vector.extract_strided_slice %11 {offsets = [24, 0], sizes = [8, 64], strides = [1, 1]} : vector<32x64xf32> to vector<8x64xf32>
    %170 = arith.addf %169, %7 : vector<8x64xf32>
    %171 = vector.broadcast %74 : vector<1x64xf32> to vector<8x64xf32>
    %172 = arith.mulf %170, %171 : vector<8x64xf32>
    %173 = vector.broadcast %77 : vector<1x64xf32> to vector<8x64xf32>
    %174 = arith.addf %172, %173 : vector<8x64xf32>
    %cst_48 = arith.constant 0.000000e+00 : f32
    %175 = vector.broadcast %cst_48 : f32 to vector<8x64xf32>
    %176 = arith.maximumf %174, %175 : vector<8x64xf32>
    %177 = vector.extract_strided_slice %176 {offsets = [0, 0], sizes = [8, 32], strides = [1, 1]} : vector<8x64xf32> to vector<8x32xf32>
    %178 = vector.extract_strided_slice %176 {offsets = [0, 32], sizes = [8, 32], strides = [1, 1]} : vector<8x64xf32> to vector<8x32xf32>
    %cst_49 = arith.constant dense<0xFF800000> : vector<8xf32>
    %179 = vector.multi_reduction <maximumf>, %177, %cst_49 [1] : vector<8x32xf32> to vector<8xf32>
    %180 = vector.shape_cast %179 : vector<8xf32> to vector<8x1xf32>
    %181 = vector.broadcast %180 : vector<8x1xf32> to vector<8x32xf32>
    %182 = arith.subf %177, %181 : vector<8x32xf32>
    %183 = math.exp %182 : vector<8x32xf32>
    %cst_50 = arith.constant dense<0.000000e+00> : vector<8xf32>
    %184 = vector.multi_reduction <add>, %183, %cst_50 [1] : vector<8x32xf32> to vector<8xf32>
    %185 = vector.shape_cast %184 : vector<8xf32> to vector<8x1xf32>
    %186 = tpu.reciprocal %185 {approx = true} : vector<8x1xf32> -> vector<8x1xf32>
    %187 = vector.broadcast %186 : vector<8x1xf32> to vector<8x32xf32>
    %188 = arith.mulf %183, %187 : vector<8x32xf32>
    %cst_51 = arith.constant 0.000000e+00 : f32
    %189 = vector.broadcast %cst_51 : f32 to vector<8x32xf32>
    %190 = arith.maximumf %178, %189 : vector<8x32xf32>
    %191 = math.absf %178 : vector<8x32xf32>
    %cst_52 = arith.constant 0.000000e+00 : f32
    %192 = vector.broadcast %cst_52 : f32 to vector<8x32xf32>
    %193 = arith.subf %192, %191 : vector<8x32xf32>
    %194 = math.exp %193 : vector<8x32xf32>
    %195 = math.log1p %194 : vector<8x32xf32>
    %196 = arith.addf %190, %195 : vector<8x32xf32>
    %197 = arith.mulf %188, %196 : vector<8x32xf32>
    %198 = arith.addf %168, %197 : vector<8x32xf32>
    %cst_53 = arith.constant dense<0.000000e+00> : vector<32xf32>
    %199 = vector.multi_reduction <add>, %198, %cst_53 [0] : vector<8x32xf32> to vector<32xf32>
    %200 = vector.shape_cast %199 : vector<32xf32> to vector<1x32xf32>
    %cst_54 = arith.constant 8.000000e+00 : f32
    %201 = vector.broadcast %cst_54 : f32 to vector<1x32xf32>
    %202 = arith.divf %200, %201 : vector<1x32xf32>
    %203 = vector.broadcast %202 : vector<1x32xf32> to vector<8x32xf32>
    %204 = arith.subf %198, %203 : vector<8x32xf32>
    %205 = arith.mulf %204, %204 : vector<8x32xf32>
    %cst_55 = arith.constant dense<0.000000e+00> : vector<32xf32>
    %206 = vector.multi_reduction <add>, %205, %cst_55 [0] : vector<8x32xf32> to vector<32xf32>
    %207 = vector.shape_cast %206 : vector<32xf32> to vector<1x32xf32>
    %cst_56 = arith.constant 8.000000e+00 : f32
    %208 = vector.broadcast %cst_56 : f32 to vector<1x32xf32>
    %209 = arith.divf %207, %208 : vector<1x32xf32>
    %cst_57 = arith.constant 9.99999974E-6 : f32
    %210 = vector.broadcast %cst_57 : f32 to vector<1x32xf32>
    %211 = arith.addf %209, %210 : vector<1x32xf32>
    %212 = math.rsqrt %211 : vector<1x32xf32>
    %213 = vector.broadcast %212 : vector<1x32xf32> to vector<8x32xf32>
    %214 = arith.mulf %204, %213 : vector<8x32xf32>
    %c0_58 = arith.constant 0 : index
    %c0_59 = arith.constant 0 : index
    %215 = vector.load %arg9[%c0_58, %c0_59] : memref<1x32xf32, #tpu.memory_space<vmem>>, vector<1x32xf32>
    %216 = vector.broadcast %215 : vector<1x32xf32> to vector<8x32xf32>
    %217 = arith.mulf %214, %216 : vector<8x32xf32>
    %c0_60 = arith.constant 0 : index
    %c0_61 = arith.constant 0 : index
    %218 = vector.load %arg10[%c0_60, %c0_61] : memref<1x32xf32, #tpu.memory_space<vmem>>, vector<1x32xf32>
    %219 = vector.broadcast %218 : vector<1x32xf32> to vector<8x32xf32>
    %220 = arith.addf %217, %219 : vector<8x32xf32>
    %221 = arith.addf %220, %0 : vector<8x32xf32>
    %cst_62 = arith.constant 0.000000e+00 : f32
    %222 = vector.broadcast %cst_62 : f32 to vector<8x32xf32>
    %223 = arith.maximumf %221, %222 : vector<8x32xf32>
    %c0_63 = arith.constant 0 : index
    %c0_64 = arith.constant 0 : index
    %224 = vector.load %arg11[%c0_63, %c0_64] : memref<8x40xf32, #tpu.memory_space<vmem>>, vector<8x40xf32>
    %c0_65 = arith.constant 0 : index
    %c0_66 = arith.constant 0 : index
    %225 = vector.load %arg13[%c0_65, %c0_66] : memref<40x64xf32, #tpu.memory_space<vmem>>, vector<40x64xf32>
    %cst_67 = arith.constant dense<0.000000e+00> : vector<8x64xf32>
    %226 = tpu.matmul %224, %225, %cst_67 {dimension_numbers = #tpu.dot_dimension_numbers<[1], [0], [0], [1], [0, 0, 1, 1], [], []>} : vector<8x40xf32>, vector<40x64xf32>, vector<8x64xf32> -> vector<8x64xf32>
    %c0_68 = arith.constant 0 : index
    %c0_69 = arith.constant 0 : index
    %227 = vector.load %arg15[%c0_68, %c0_69] : memref<1x64xf32, #tpu.memory_space<vmem>>, vector<1x64xf32>
    %228 = vector.broadcast %227 : vector<1x64xf32> to vector<8x64xf32>
    %229 = arith.addf %226, %228 : vector<8x64xf32>
    %c0_70 = arith.constant 0 : index
    %c0_71 = arith.constant 0 : index
    %230 = vector.load %arg12[%c0_70, %c0_71] : memref<4x40xf32, #tpu.memory_space<vmem>>, vector<4x40xf32>
    %c0_72 = arith.constant 0 : index
    %c0_73 = arith.constant 0 : index
    %231 = vector.load %arg14[%c0_72, %c0_73] : memref<40x64xf32, #tpu.memory_space<vmem>>, vector<40x64xf32>
    %cst_74 = arith.constant dense<0.000000e+00> : vector<4x64xf32>
    %232 = tpu.matmul %230, %231, %cst_74 {dimension_numbers = #tpu.dot_dimension_numbers<[1], [0], [0], [1], [0, 0, 1, 1], [], []>} : vector<4x40xf32>, vector<40x64xf32>, vector<4x64xf32> -> vector<4x64xf32>
    %cst_75 = arith.constant dense<0.000000e+00> : vector<32x64xf32>
    %233 = tpu.matmul %1, %232, %cst_75 {dimension_numbers = #tpu.dot_dimension_numbers<[1], [0], [0], [1], [0, 0, 1, 1], [], []>} : vector<32x4xf32>, vector<4x64xf32>, vector<32x64xf32> -> vector<32x64xf32>
    %cst_76 = arith.constant 0.000000e+00 : f32
    %234 = vector.broadcast %cst_76 : f32 to vector<1x64xf32>
    %235 = vector.extract_strided_slice %233 {offsets = [0, 0], sizes = [8, 64], strides = [1, 1]} : vector<32x64xf32> to vector<8x64xf32>
    %236 = arith.addf %235, %229 : vector<8x64xf32>
    %cst_77 = arith.constant dense<0.000000e+00> : vector<64xf32>
    %237 = vector.multi_reduction <add>, %236, %cst_77 [0] : vector<8x64xf32> to vector<64xf32>
    %238 = vector.shape_cast %237 : vector<64xf32> to vector<1x64xf32>
    %239 = arith.addf %234, %238 : vector<1x64xf32>
    %240 = vector.extract_strided_slice %233 {offsets = [8, 0], sizes = [8, 64], strides = [1, 1]} : vector<32x64xf32> to vector<8x64xf32>
    %241 = arith.addf %240, %229 : vector<8x64xf32>
    %cst_78 = arith.constant dense<0.000000e+00> : vector<64xf32>
    %242 = vector.multi_reduction <add>, %241, %cst_78 [0] : vector<8x64xf32> to vector<64xf32>
    %243 = vector.shape_cast %242 : vector<64xf32> to vector<1x64xf32>
    %244 = arith.addf %239, %243 : vector<1x64xf32>
    %245 = vector.extract_strided_slice %233 {offsets = [16, 0], sizes = [8, 64], strides = [1, 1]} : vector<32x64xf32> to vector<8x64xf32>
    %246 = arith.addf %245, %229 : vector<8x64xf32>
    %cst_79 = arith.constant dense<0.000000e+00> : vector<64xf32>
    %247 = vector.multi_reduction <add>, %246, %cst_79 [0] : vector<8x64xf32> to vector<64xf32>
    %248 = vector.shape_cast %247 : vector<64xf32> to vector<1x64xf32>
    %249 = arith.addf %244, %248 : vector<1x64xf32>
    %250 = vector.extract_strided_slice %233 {offsets = [24, 0], sizes = [8, 64], strides = [1, 1]} : vector<32x64xf32> to vector<8x64xf32>
    %251 = arith.addf %250, %229 : vector<8x64xf32>
    %cst_80 = arith.constant dense<0.000000e+00> : vector<64xf32>
    %252 = vector.multi_reduction <add>, %251, %cst_80 [0] : vector<8x64xf32> to vector<64xf32>
    %253 = vector.shape_cast %252 : vector<64xf32> to vector<1x64xf32>
    %254 = arith.addf %249, %253 : vector<1x64xf32>
    %cst_81 = arith.constant 3.200000e+01 : f32
    %255 = vector.broadcast %cst_81 : f32 to vector<1x64xf32>
    %256 = arith.divf %254, %255 : vector<1x64xf32>
    %cst_82 = arith.constant 0.000000e+00 : f32
    %257 = vector.broadcast %cst_82 : f32 to vector<1x64xf32>
    %258 = vector.extract_strided_slice %233 {offsets = [0, 0], sizes = [8, 64], strides = [1, 1]} : vector<32x64xf32> to vector<8x64xf32>
    %259 = arith.addf %258, %229 : vector<8x64xf32>
    %260 = vector.broadcast %256 : vector<1x64xf32> to vector<8x64xf32>
    %261 = arith.subf %259, %260 : vector<8x64xf32>
    %262 = arith.mulf %261, %261 : vector<8x64xf32>
    %cst_83 = arith.constant dense<0.000000e+00> : vector<64xf32>
    %263 = vector.multi_reduction <add>, %262, %cst_83 [0] : vector<8x64xf32> to vector<64xf32>
    %264 = vector.shape_cast %263 : vector<64xf32> to vector<1x64xf32>
    %265 = arith.addf %257, %264 : vector<1x64xf32>
    %266 = vector.extract_strided_slice %233 {offsets = [8, 0], sizes = [8, 64], strides = [1, 1]} : vector<32x64xf32> to vector<8x64xf32>
    %267 = arith.addf %266, %229 : vector<8x64xf32>
    %268 = vector.broadcast %256 : vector<1x64xf32> to vector<8x64xf32>
    %269 = arith.subf %267, %268 : vector<8x64xf32>
    %270 = arith.mulf %269, %269 : vector<8x64xf32>
    %cst_84 = arith.constant dense<0.000000e+00> : vector<64xf32>
    %271 = vector.multi_reduction <add>, %270, %cst_84 [0] : vector<8x64xf32> to vector<64xf32>
    %272 = vector.shape_cast %271 : vector<64xf32> to vector<1x64xf32>
    %273 = arith.addf %265, %272 : vector<1x64xf32>
    %274 = vector.extract_strided_slice %233 {offsets = [16, 0], sizes = [8, 64], strides = [1, 1]} : vector<32x64xf32> to vector<8x64xf32>
    %275 = arith.addf %274, %229 : vector<8x64xf32>
    %276 = vector.broadcast %256 : vector<1x64xf32> to vector<8x64xf32>
    %277 = arith.subf %275, %276 : vector<8x64xf32>
    %278 = arith.mulf %277, %277 : vector<8x64xf32>
    %cst_85 = arith.constant dense<0.000000e+00> : vector<64xf32>
    %279 = vector.multi_reduction <add>, %278, %cst_85 [0] : vector<8x64xf32> to vector<64xf32>
    %280 = vector.shape_cast %279 : vector<64xf32> to vector<1x64xf32>
    %281 = arith.addf %273, %280 : vector<1x64xf32>
    %282 = vector.extract_strided_slice %233 {offsets = [24, 0], sizes = [8, 64], strides = [1, 1]} : vector<32x64xf32> to vector<8x64xf32>
    %283 = arith.addf %282, %229 : vector<8x64xf32>
    %284 = vector.broadcast %256 : vector<1x64xf32> to vector<8x64xf32>
    %285 = arith.subf %283, %284 : vector<8x64xf32>
    %286 = arith.mulf %285, %285 : vector<8x64xf32>
    %cst_86 = arith.constant dense<0.000000e+00> : vector<64xf32>
    %287 = vector.multi_reduction <add>, %286, %cst_86 [0] : vector<8x64xf32> to vector<64xf32>
    %288 = vector.shape_cast %287 : vector<64xf32> to vector<1x64xf32>
    %289 = arith.addf %281, %288 : vector<1x64xf32>
    %cst_87 = arith.constant 3.200000e+01 : f32
    %290 = vector.broadcast %cst_87 : f32 to vector<1x64xf32>
    %291 = arith.divf %289, %290 : vector<1x64xf32>
    %cst_88 = arith.constant 9.99999974E-6 : f32
    %292 = vector.broadcast %cst_88 : f32 to vector<1x64xf32>
    %293 = arith.addf %291, %292 : vector<1x64xf32>
    %294 = math.rsqrt %293 : vector<1x64xf32>
    %c0_89 = arith.constant 0 : index
    %c0_90 = arith.constant 0 : index
    %295 = vector.load %arg16[%c0_89, %c0_90] : memref<1x64xf32, #tpu.memory_space<vmem>>, vector<1x64xf32>
    %296 = arith.mulf %294, %295 : vector<1x64xf32>
    %c0_91 = arith.constant 0 : index
    %c0_92 = arith.constant 0 : index
    %297 = vector.load %arg17[%c0_91, %c0_92] : memref<1x64xf32, #tpu.memory_space<vmem>>, vector<1x64xf32>
    %298 = arith.mulf %256, %296 : vector<1x64xf32>
    %299 = arith.subf %297, %298 : vector<1x64xf32>
    %cst_93 = arith.constant 0.000000e+00 : f32
    %300 = vector.broadcast %cst_93 : f32 to vector<8x32xf32>
    %301 = vector.extract_strided_slice %233 {offsets = [0, 0], sizes = [8, 64], strides = [1, 1]} : vector<32x64xf32> to vector<8x64xf32>
    %302 = arith.addf %301, %229 : vector<8x64xf32>
    %303 = vector.broadcast %296 : vector<1x64xf32> to vector<8x64xf32>
    %304 = arith.mulf %302, %303 : vector<8x64xf32>
    %305 = vector.broadcast %299 : vector<1x64xf32> to vector<8x64xf32>
    %306 = arith.addf %304, %305 : vector<8x64xf32>
    %cst_94 = arith.constant 0.000000e+00 : f32
    %307 = vector.broadcast %cst_94 : f32 to vector<8x64xf32>
    %308 = arith.maximumf %306, %307 : vector<8x64xf32>
    %309 = vector.extract_strided_slice %308 {offsets = [0, 0], sizes = [8, 32], strides = [1, 1]} : vector<8x64xf32> to vector<8x32xf32>
    %310 = vector.extract_strided_slice %308 {offsets = [0, 32], sizes = [8, 32], strides = [1, 1]} : vector<8x64xf32> to vector<8x32xf32>
    %cst_95 = arith.constant dense<0xFF800000> : vector<8xf32>
    %311 = vector.multi_reduction <maximumf>, %309, %cst_95 [1] : vector<8x32xf32> to vector<8xf32>
    %312 = vector.shape_cast %311 : vector<8xf32> to vector<8x1xf32>
    %313 = vector.broadcast %312 : vector<8x1xf32> to vector<8x32xf32>
    %314 = arith.subf %309, %313 : vector<8x32xf32>
    %315 = math.exp %314 : vector<8x32xf32>
    %cst_96 = arith.constant dense<0.000000e+00> : vector<8xf32>
    %316 = vector.multi_reduction <add>, %315, %cst_96 [1] : vector<8x32xf32> to vector<8xf32>
    %317 = vector.shape_cast %316 : vector<8xf32> to vector<8x1xf32>
    %318 = tpu.reciprocal %317 {approx = true} : vector<8x1xf32> -> vector<8x1xf32>
    %319 = vector.broadcast %318 : vector<8x1xf32> to vector<8x32xf32>
    %320 = arith.mulf %315, %319 : vector<8x32xf32>
    %cst_97 = arith.constant 0.000000e+00 : f32
    %321 = vector.broadcast %cst_97 : f32 to vector<8x32xf32>
    %322 = arith.maximumf %310, %321 : vector<8x32xf32>
    %323 = math.absf %310 : vector<8x32xf32>
    %cst_98 = arith.constant 0.000000e+00 : f32
    %324 = vector.broadcast %cst_98 : f32 to vector<8x32xf32>
    %325 = arith.subf %324, %323 : vector<8x32xf32>
    %326 = math.exp %325 : vector<8x32xf32>
    %327 = math.log1p %326 : vector<8x32xf32>
    %328 = arith.addf %322, %327 : vector<8x32xf32>
    %329 = arith.mulf %320, %328 : vector<8x32xf32>
    %330 = arith.addf %300, %329 : vector<8x32xf32>
    %331 = vector.extract_strided_slice %233 {offsets = [8, 0], sizes = [8, 64], strides = [1, 1]} : vector<32x64xf32> to vector<8x64xf32>
    %332 = arith.addf %331, %229 : vector<8x64xf32>
    %333 = vector.broadcast %296 : vector<1x64xf32> to vector<8x64xf32>
    %334 = arith.mulf %332, %333 : vector<8x64xf32>
    %335 = vector.broadcast %299 : vector<1x64xf32> to vector<8x64xf32>
    %336 = arith.addf %334, %335 : vector<8x64xf32>
    %cst_99 = arith.constant 0.000000e+00 : f32
    %337 = vector.broadcast %cst_99 : f32 to vector<8x64xf32>
    %338 = arith.maximumf %336, %337 : vector<8x64xf32>
    %339 = vector.extract_strided_slice %338 {offsets = [0, 0], sizes = [8, 32], strides = [1, 1]} : vector<8x64xf32> to vector<8x32xf32>
    %340 = vector.extract_strided_slice %338 {offsets = [0, 32], sizes = [8, 32], strides = [1, 1]} : vector<8x64xf32> to vector<8x32xf32>
    %cst_100 = arith.constant dense<0xFF800000> : vector<8xf32>
    %341 = vector.multi_reduction <maximumf>, %339, %cst_100 [1] : vector<8x32xf32> to vector<8xf32>
    %342 = vector.shape_cast %341 : vector<8xf32> to vector<8x1xf32>
    %343 = vector.broadcast %342 : vector<8x1xf32> to vector<8x32xf32>
    %344 = arith.subf %339, %343 : vector<8x32xf32>
    %345 = math.exp %344 : vector<8x32xf32>
    %cst_101 = arith.constant dense<0.000000e+00> : vector<8xf32>
    %346 = vector.multi_reduction <add>, %345, %cst_101 [1] : vector<8x32xf32> to vector<8xf32>
    %347 = vector.shape_cast %346 : vector<8xf32> to vector<8x1xf32>
    %348 = tpu.reciprocal %347 {approx = true} : vector<8x1xf32> -> vector<8x1xf32>
    %349 = vector.broadcast %348 : vector<8x1xf32> to vector<8x32xf32>
    %350 = arith.mulf %345, %349 : vector<8x32xf32>
    %cst_102 = arith.constant 0.000000e+00 : f32
    %351 = vector.broadcast %cst_102 : f32 to vector<8x32xf32>
    %352 = arith.maximumf %340, %351 : vector<8x32xf32>
    %353 = math.absf %340 : vector<8x32xf32>
    %cst_103 = arith.constant 0.000000e+00 : f32
    %354 = vector.broadcast %cst_103 : f32 to vector<8x32xf32>
    %355 = arith.subf %354, %353 : vector<8x32xf32>
    %356 = math.exp %355 : vector<8x32xf32>
    %357 = math.log1p %356 : vector<8x32xf32>
    %358 = arith.addf %352, %357 : vector<8x32xf32>
    %359 = arith.mulf %350, %358 : vector<8x32xf32>
    %360 = arith.addf %330, %359 : vector<8x32xf32>
    %361 = vector.extract_strided_slice %233 {offsets = [16, 0], sizes = [8, 64], strides = [1, 1]} : vector<32x64xf32> to vector<8x64xf32>
    %362 = arith.addf %361, %229 : vector<8x64xf32>
    %363 = vector.broadcast %296 : vector<1x64xf32> to vector<8x64xf32>
    %364 = arith.mulf %362, %363 : vector<8x64xf32>
    %365 = vector.broadcast %299 : vector<1x64xf32> to vector<8x64xf32>
    %366 = arith.addf %364, %365 : vector<8x64xf32>
    %cst_104 = arith.constant 0.000000e+00 : f32
    %367 = vector.broadcast %cst_104 : f32 to vector<8x64xf32>
    %368 = arith.maximumf %366, %367 : vector<8x64xf32>
    %369 = vector.extract_strided_slice %368 {offsets = [0, 0], sizes = [8, 32], strides = [1, 1]} : vector<8x64xf32> to vector<8x32xf32>
    %370 = vector.extract_strided_slice %368 {offsets = [0, 32], sizes = [8, 32], strides = [1, 1]} : vector<8x64xf32> to vector<8x32xf32>
    %cst_105 = arith.constant dense<0xFF800000> : vector<8xf32>
    %371 = vector.multi_reduction <maximumf>, %369, %cst_105 [1] : vector<8x32xf32> to vector<8xf32>
    %372 = vector.shape_cast %371 : vector<8xf32> to vector<8x1xf32>
    %373 = vector.broadcast %372 : vector<8x1xf32> to vector<8x32xf32>
    %374 = arith.subf %369, %373 : vector<8x32xf32>
    %375 = math.exp %374 : vector<8x32xf32>
    %cst_106 = arith.constant dense<0.000000e+00> : vector<8xf32>
    %376 = vector.multi_reduction <add>, %375, %cst_106 [1] : vector<8x32xf32> to vector<8xf32>
    %377 = vector.shape_cast %376 : vector<8xf32> to vector<8x1xf32>
    %378 = tpu.reciprocal %377 {approx = true} : vector<8x1xf32> -> vector<8x1xf32>
    %379 = vector.broadcast %378 : vector<8x1xf32> to vector<8x32xf32>
    %380 = arith.mulf %375, %379 : vector<8x32xf32>
    %cst_107 = arith.constant 0.000000e+00 : f32
    %381 = vector.broadcast %cst_107 : f32 to vector<8x32xf32>
    %382 = arith.maximumf %370, %381 : vector<8x32xf32>
    %383 = math.absf %370 : vector<8x32xf32>
    %cst_108 = arith.constant 0.000000e+00 : f32
    %384 = vector.broadcast %cst_108 : f32 to vector<8x32xf32>
    %385 = arith.subf %384, %383 : vector<8x32xf32>
    %386 = math.exp %385 : vector<8x32xf32>
    %387 = math.log1p %386 : vector<8x32xf32>
    %388 = arith.addf %382, %387 : vector<8x32xf32>
    %389 = arith.mulf %380, %388 : vector<8x32xf32>
    %390 = arith.addf %360, %389 : vector<8x32xf32>
    %391 = vector.extract_strided_slice %233 {offsets = [24, 0], sizes = [8, 64], strides = [1, 1]} : vector<32x64xf32> to vector<8x64xf32>
    %392 = arith.addf %391, %229 : vector<8x64xf32>
    %393 = vector.broadcast %296 : vector<1x64xf32> to vector<8x64xf32>
    %394 = arith.mulf %392, %393 : vector<8x64xf32>
    %395 = vector.broadcast %299 : vector<1x64xf32> to vector<8x64xf32>
    %396 = arith.addf %394, %395 : vector<8x64xf32>
    %cst_109 = arith.constant 0.000000e+00 : f32
    %397 = vector.broadcast %cst_109 : f32 to vector<8x64xf32>
    %398 = arith.maximumf %396, %397 : vector<8x64xf32>
    %399 = vector.extract_strided_slice %398 {offsets = [0, 0], sizes = [8, 32], strides = [1, 1]} : vector<8x64xf32> to vector<8x32xf32>
    %400 = vector.extract_strided_slice %398 {offsets = [0, 32], sizes = [8, 32], strides = [1, 1]} : vector<8x64xf32> to vector<8x32xf32>
    %cst_110 = arith.constant dense<0xFF800000> : vector<8xf32>
    %401 = vector.multi_reduction <maximumf>, %399, %cst_110 [1] : vector<8x32xf32> to vector<8xf32>
    %402 = vector.shape_cast %401 : vector<8xf32> to vector<8x1xf32>
    %403 = vector.broadcast %402 : vector<8x1xf32> to vector<8x32xf32>
    %404 = arith.subf %399, %403 : vector<8x32xf32>
    %405 = math.exp %404 : vector<8x32xf32>
    %cst_111 = arith.constant dense<0.000000e+00> : vector<8xf32>
    %406 = vector.multi_reduction <add>, %405, %cst_111 [1] : vector<8x32xf32> to vector<8xf32>
    %407 = vector.shape_cast %406 : vector<8xf32> to vector<8x1xf32>
    %408 = tpu.reciprocal %407 {approx = true} : vector<8x1xf32> -> vector<8x1xf32>
    %409 = vector.broadcast %408 : vector<8x1xf32> to vector<8x32xf32>
    %410 = arith.mulf %405, %409 : vector<8x32xf32>
    %cst_112 = arith.constant 0.000000e+00 : f32
    %411 = vector.broadcast %cst_112 : f32 to vector<8x32xf32>
    %412 = arith.maximumf %400, %411 : vector<8x32xf32>
    %413 = math.absf %400 : vector<8x32xf32>
    %cst_113 = arith.constant 0.000000e+00 : f32
    %414 = vector.broadcast %cst_113 : f32 to vector<8x32xf32>
    %415 = arith.subf %414, %413 : vector<8x32xf32>
    %416 = math.exp %415 : vector<8x32xf32>
    %417 = math.log1p %416 : vector<8x32xf32>
    %418 = arith.addf %412, %417 : vector<8x32xf32>
    %419 = arith.mulf %410, %418 : vector<8x32xf32>
    %420 = arith.addf %390, %419 : vector<8x32xf32>
    %cst_114 = arith.constant dense<0.000000e+00> : vector<32xf32>
    %421 = vector.multi_reduction <add>, %420, %cst_114 [0] : vector<8x32xf32> to vector<32xf32>
    %422 = vector.shape_cast %421 : vector<32xf32> to vector<1x32xf32>
    %cst_115 = arith.constant 8.000000e+00 : f32
    %423 = vector.broadcast %cst_115 : f32 to vector<1x32xf32>
    %424 = arith.divf %422, %423 : vector<1x32xf32>
    %425 = vector.broadcast %424 : vector<1x32xf32> to vector<8x32xf32>
    %426 = arith.subf %420, %425 : vector<8x32xf32>
    %427 = arith.mulf %426, %426 : vector<8x32xf32>
    %cst_116 = arith.constant dense<0.000000e+00> : vector<32xf32>
    %428 = vector.multi_reduction <add>, %427, %cst_116 [0] : vector<8x32xf32> to vector<32xf32>
    %429 = vector.shape_cast %428 : vector<32xf32> to vector<1x32xf32>
    %cst_117 = arith.constant 8.000000e+00 : f32
    %430 = vector.broadcast %cst_117 : f32 to vector<1x32xf32>
    %431 = arith.divf %429, %430 : vector<1x32xf32>
    %cst_118 = arith.constant 9.99999974E-6 : f32
    %432 = vector.broadcast %cst_118 : f32 to vector<1x32xf32>
    %433 = arith.addf %431, %432 : vector<1x32xf32>
    %434 = math.rsqrt %433 : vector<1x32xf32>
    %435 = vector.broadcast %434 : vector<1x32xf32> to vector<8x32xf32>
    %436 = arith.mulf %426, %435 : vector<8x32xf32>
    %c0_119 = arith.constant 0 : index
    %c0_120 = arith.constant 0 : index
    %437 = vector.load %arg18[%c0_119, %c0_120] : memref<1x32xf32, #tpu.memory_space<vmem>>, vector<1x32xf32>
    %438 = vector.broadcast %437 : vector<1x32xf32> to vector<8x32xf32>
    %439 = arith.mulf %436, %438 : vector<8x32xf32>
    %c0_121 = arith.constant 0 : index
    %c0_122 = arith.constant 0 : index
    %440 = vector.load %arg19[%c0_121, %c0_122] : memref<1x32xf32, #tpu.memory_space<vmem>>, vector<1x32xf32>
    %441 = vector.broadcast %440 : vector<1x32xf32> to vector<8x32xf32>
    %442 = arith.addf %439, %441 : vector<8x32xf32>
    %443 = arith.addf %442, %0 : vector<8x32xf32>
    %cst_123 = arith.constant 0.000000e+00 : f32
    %444 = vector.broadcast %cst_123 : f32 to vector<8x32xf32>
    %445 = arith.maximumf %443, %444 : vector<8x32xf32>
    %c0_124 = arith.constant 0 : index
    %c0_125 = arith.constant 0 : index
    %446 = vector.load %arg20[%c0_124, %c0_125] : memref<64x32xf32, #tpu.memory_space<vmem>>, vector<64x32xf32>
    %447 = vector.extract_strided_slice %446 {offsets = [0, 0], sizes = [32, 32], strides = [1, 1]} : vector<64x32xf32> to vector<32x32xf32>
    %cst_126 = arith.constant dense<0.000000e+00> : vector<8x32xf32>
    %448 = tpu.matmul %223, %447, %cst_126 {dimension_numbers = #tpu.dot_dimension_numbers<[1], [0], [0], [1], [0, 0, 1, 1], [], []>} : vector<8x32xf32>, vector<32x32xf32>, vector<8x32xf32> -> vector<8x32xf32>
    %449 = vector.extract_strided_slice %446 {offsets = [32, 0], sizes = [32, 32], strides = [1, 1]} : vector<64x32xf32> to vector<32x32xf32>
    %cst_127 = arith.constant dense<0.000000e+00> : vector<8x32xf32>
    %450 = tpu.matmul %445, %449, %cst_127 {dimension_numbers = #tpu.dot_dimension_numbers<[1], [0], [0], [1], [0, 0, 1, 1], [], []>} : vector<8x32xf32>, vector<32x32xf32>, vector<8x32xf32> -> vector<8x32xf32>
    %451 = arith.addf %448, %450 : vector<8x32xf32>
    %c0_128 = arith.constant 0 : index
    %c0_129 = arith.constant 0 : index
    %452 = vector.load %arg21[%c0_128, %c0_129] : memref<1x32xf32, #tpu.memory_space<vmem>>, vector<1x32xf32>
    %453 = vector.broadcast %452 : vector<1x32xf32> to vector<8x32xf32>
    %454 = arith.addf %451, %453 : vector<8x32xf32>
    %cst_130 = arith.constant 0.000000e+00 : f32
    %455 = vector.broadcast %cst_130 : f32 to vector<8x32xf32>
    %456 = arith.maximumf %454, %455 : vector<8x32xf32>
    %c0_131 = arith.constant 0 : index
    %c0_132 = arith.constant 0 : index
    %457 = vector.load %arg22[%c0_131, %c0_132] : memref<8x32xf32, #tpu.memory_space<vmem>>, vector<8x32xf32>
    tpu.vector_store %arg22[%c0_131, %c0_132], %456 {strides = array<i32>} : memref<8x32xf32, #tpu.memory_space<vmem>>, vector<8x32xf32>,
    return
  }
}

</mosaic_0001>

<llo_original>
// kernel: tpu_custom_call.1
$region0: #{tpu_custom_call.1}
  #allocation0 [shape = 'u32[]', space=smem, size = 0x4, offset = 0x4, fixed_abs, tag = 'smem constant byte address 0x4 - core index']
  #allocation1 [shape = 'u32[144,128]{1,0:T(1,128)}', space=vmem, size = 0x12000, scoped, tag = 'internal scratch']
  %s0 = inlined_call_operand.hbm [shape: f32[8,32], index: 0, kind: input, shape index: {}]
  %s1 = inlined_call_operand.vmem [shape: f32[32,4], index: 1, kind: input, shape index: {}]
  %s2 = inlined_call_operand.hbm [shape: f32[8,40], index: 2, kind: input, shape index: {}]
  %s3 = inlined_call_operand.vmem [shape: f32[4,40], index: 3, kind: input, shape index: {}]
  %s4 = inlined_call_operand.vmem [shape: f32[40,64], index: 4, kind: input, shape index: {}]
  %s5 = inlined_call_operand.vmem [shape: f32[40,64], index: 5, kind: input, shape index: {}]
  %s6 = inlined_call_operand.vmem [shape: f32[1,64], index: 6, kind: input, shape index: {}]
  %s7 = inlined_call_operand.vmem [shape: f32[1,64], index: 7, kind: input, shape index: {}]
  %s8 = inlined_call_operand.vmem [shape: f32[1,64], index: 8, kind: input, shape index: {}]
  %s9 = inlined_call_operand.hbm [shape: f32[1,32], index: 9, kind: input, shape index: {}]
  %s10 = inlined_call_operand.hbm [shape: f32[1,32], index: 10, kind: input, shape index: {}]
  %s11 = inlined_call_operand.hbm [shape: f32[8,40], index: 11, kind: input, shape index: {}]
  %s12 = inlined_call_operand.hbm [shape: f32[4,40], index: 12, kind: input, shape index: {}]
  %s13 = inlined_call_operand.vmem [shape: f32[40,64], index: 13, kind: input, shape index: {}]
  %s14 = inlined_call_operand.hbm [shape: f32[40,64], index: 14, kind: input, shape index: {}]
  %s15 = inlined_call_operand.hbm [shape: f32[1,64], index: 15, kind: input, shape index: {}]
  %s16 = inlined_call_operand.vmem [shape: f32[1,64], index: 16, kind: input, shape index: {}]
  %s17 = inlined_call_operand.vmem [shape: f32[1,64], index: 17, kind: input, shape index: {}]
  %s18 = inlined_call_operand.vmem [shape: f32[1,32], index: 18, kind: input, shape index: {}]
  %s19 = inlined_call_operand.vmem [shape: f32[1,32], index: 19, kind: input, shape index: {}]
  %s20 = inlined_call_operand.vmem [shape: f32[64,32], index: 20, kind: input, shape index: {}]
  %s21 = inlined_call_operand.vmem [shape: f32[1,32], index: 21, kind: input, shape index: {}]
  %s22 = inlined_call_operand.hbm [shape: f32[8,32], index: 22, kind: output, shape index: {}]
  %s23 = sld [smem:[#allocation0]]
  $region130: #{tpu_custom_call.1} parent=0
    _
  %s25 = ssub.s32 1, %s23
  %s26 = scalar_select 0, %s25, %s23
  $region1: #{tpu_custom_call.1} parent=0
    #allocation2 [shape = 'u8[4096]{0}', space=vmem, size = 0x1000, scoped, tag = 'input window, operand 0, single buffered']
    #allocation3 [shape = 's32[1]{0}', space=sflag, size = 0x4, scoped, tag = 'scoped memory for tpu_custom_call.1']
    #allocation4 [shape = 's32[1]{0}', space=sflag, size = 0x4, scoped, tag = 'scoped memory for tpu_custom_call.1']
    #allocation5 [shape = 'u8[4096]{0}', space=vmem, size = 0x1000, scoped, tag = 'input window, operand 2, single buffered']
    #allocation6 [shape = 's32[1]{0}', space=sflag, size = 0x4, scoped, tag = 'scoped memory for tpu_custom_call.1']
    #allocation7 [shape = 'u8[512]{0}', space=vmem, size = 0x400, scoped, tag = 'input window, operand 9, single buffered']
    #allocation8 [shape = 'u8[512]{0}', space=vmem, size = 0x400, scoped, tag = 'input window, operand 10, single buffered']
    #allocation9 [shape = 's32[1]{0}', space=sflag, size = 0x4, scoped, tag = 'scoped memory for tpu_custom_call.1']
    #allocation10 [shape = 'u8[4096]{0}', space=vmem, size = 0x1000, scoped, tag = 'input window, operand 11, single buffered']
    #allocation11 [shape = 'u8[2048]{0}', space=vmem, size = 0x800, scoped, tag = 'input window, operand 12, single buffered']
    #allocation12 [shape = 's32[1]{0}', space=sflag, size = 0x4, scoped, tag = 'scoped memory for tpu_custom_call.1']
    #allocation13 [shape = 'u8[20480]{0}', space=vmem, size = 0x5000, scoped, tag = 'input window, operand 14, single buffered']
    #allocation14 [shape = 'u8[512]{0}', space=vmem, size = 0x400, scoped, tag = 'input window, operand 15, single buffered']
    #allocation15 [shape = 's32[1]{0}', space=sflag, size = 0x4, scoped, tag = 'scoped memory for tpu_custom_call.1']
    #allocation16 [shape = 'u8[4096]{0}', space=vmem, size = 0x1000, scoped, tag = 'output window, operand 0, single buffered']
    %27 = vsyncpa [#allocation3], 0
    %28 = vsyncpa [#allocation6], 0
    %29 = vsyncpa [#allocation9], 0
    %30 = vsyncpa [#allocation12], 0
    %31 = vsyncpa [#allocation15], 0
    %32 = vsyncpa [#allocation4], 0
    // Predicated region
    $region2: #{tpu_custom_call.1} parent=1 // pred_check
      _
    $region3: #{tpu_custom_call.1} parent=1 // pred_check_branch
      %34 = sbr.rel (0) target = $region5
    $region4: #{tpu_custom_call.1} parent=1 // pred_region
      %s36 = ssub.s32 128, 128
      %37 = vsyncadd [#allocation3], %s36
      %s39 = sshll.u32 [#allocation2], 4
      %s40 = int_to_ptr.vmem [resolvable:$true] %s39
      %42 = dma.hbm_to_vmem [thread:$0]  %s0, 128, %s40, [#allocation3]
    $region5: #{tpu_custom_call.1} parent=1 // pred_fallthru
      _
    // Predicated region
    $region6: #{tpu_custom_call.1} parent=1 // pred_check
      _
    $region7: #{tpu_custom_call.1} parent=1 // pred_check_branch
      %44 = sbr.rel (0) target = $region9
    $region8: #{tpu_custom_call.1} parent=1 // pred_region
      _
    $region9: #{tpu_custom_call.1} parent=1 // pred_fallthru
      _
    // Predicated region
    $region10: #{tpu_custom_call.1} parent=1 // pred_check
      _
    $region11: #{tpu_custom_call.1} parent=1 // pred_check_branch
      %46 = sbr.rel (0) target = $region13
    $region12: #{tpu_custom_call.1} parent=1 // pred_region
      %s48 = ssub.s32 128, 128
      %49 = vsyncadd [#allocation6], %s48
      %s51 = sshll.u32 [#allocation5], 4
      %s52 = int_to_ptr.vmem [resolvable:$true] %s51
      %54 = dma.hbm_to_vmem [thread:$0]  %s2, 128, %s52, [#allocation6]
    $region13: #{tpu_custom_call.1} parent=1 // pred_fallthru
      _
    // Predicated region
    $region14: #{tpu_custom_call.1} parent=1 // pred_check
      _
    $region15: #{tpu_custom_call.1} parent=1 // pred_check_branch
      %56 = sbr.rel (0) target = $region17
    $region16: #{tpu_custom_call.1} parent=1 // pred_region
      _
    $region17: #{tpu_custom_call.1} parent=1 // pred_fallthru
      _
    // Predicated region
    $region18: #{tpu_custom_call.1} parent=1 // pred_check
      _
    $region19: #{tpu_custom_call.1} parent=1 // pred_check_branch
      %58 = sbr.rel (0) target = $region21
    $region20: #{tpu_custom_call.1} parent=1 // pred_region
      _
    $region21: #{tpu_custom_call.1} parent=1 // pred_fallthru
      _
    // Predicated region
    $region22: #{tpu_custom_call.1} parent=1 // pred_check
      _
    $region23: #{tpu_custom_call.1} parent=1 // pred_check_branch
      %60 = sbr.rel (0) target = $region25
    $region24: #{tpu_custom_call.1} parent=1 // pred_region
      _
    $region25: #{tpu_custom_call.1} parent=1 // pred_fallthru
      _
    // Predicated region
    $region26: #{tpu_custom_call.1} parent=1 // pred_check
      _
    $region27: #{tpu_custom_call.1} parent=1 // pred_check_branch
      %62 = sbr.rel (0) target = $region29
    $region28: #{tpu_custom_call.1} parent=1 // pred_region
      _
    $region29: #{tpu_custom_call.1} parent=1 // pred_fallthru
      _
    // Predicated region
    $region30: #{tpu_custom_call.1} parent=1 // pred_check
      _
    $region31: #{tpu_custom_call.1} parent=1 // pred_check_branch
      %64 = sbr.rel (0) target = $region33
    $region32: #{tpu_custom_call.1} parent=1 // pred_region
      _
    $region33: #{tpu_custom_call.1} parent=1 // pred_fallthru
      _
    // Predicated region
    $region34: #{tpu_custom_call.1} parent=1 // pred_check
      _
    $region35: #{tpu_custom_call.1} parent=1 // pred_check_branch
      %66 = sbr.rel (0) target = $region37
    $region36: #{tpu_custom_call.1} parent=1 // pred_region
      _
    $region37: #{tpu_custom_call.1} parent=1 // pred_fallthru
      _
    // Predicated region
    $region38: #{tpu_custom_call.1} parent=1 // pred_check
      _
    $region39: #{tpu_custom_call.1} parent=1 // pred_check_branch
      %68 = sbr.rel (0) target = $region41
    $region40: #{tpu_custom_call.1} parent=1 // pred_region
      %s70 = ssub.s32 16, 16
      %71 = vsyncadd [#allocation6], %s70
      %s73 = sshll.u32 [#allocation7], 4
      %s74 = int_to_ptr.vmem [resolvable:$true] %s73
      %76 = dma.hbm_to_vmem [thread:$0]  %s9, 16, %s74, [#allocation6]
    $region41: #{tpu_custom_call.1} parent=1 // pred_fallthru
      _
    // Predicated region
    $region42: #{tpu_custom_call.1} parent=1 // pred_check
      _
    $region43: #{tpu_custom_call.1} parent=1 // pred_check_branch
      %78 = sbr.rel (0) target = $region45
    $region44: #{tpu_custom_call.1} parent=1 // pred_region
      %s80 = ssub.s32 16, 16
      %81 = vsyncadd [#allocation9], %s80
      %s83 = sshll.u32 [#allocation8], 4
      %s84 = int_to_ptr.vmem [resolvable:$true] %s83
      %86 = dma.hbm_to_vmem [thread:$0]  %s10, 16, %s84, [#allocation9]
    $region45: #{tpu_custom_call.1} parent=1 // pred_fallthru
      _
    // Predicated region
    $region46: #{tpu_custom_call.1} parent=1 // pred_check
      _
    $region47: #{tpu_custom_call.1} parent=1 // pred_check_branch
      %88 = sbr.rel (0) target = $region49
    $region48: #{tpu_custom_call.1} parent=1 // pred_region
      %s90 = ssub.s32 128, 128
      %91 = vsyncadd [#allocation9], %s90
      %s93 = sshll.u32 [#allocation10], 4
      %s94 = int_to_ptr.vmem [resolvable:$true] %s93
      %96 = dma.hbm_to_vmem [thread:$0]  %s11, 128, %s94, [#allocation9]
    $region49: #{tpu_custom_call.1} parent=1 // pred_fallthru
      _
    // Predicated region
    $region50: #{tpu_custom_call.1} parent=1 // pred_check
      _
    $region51: #{tpu_custom_call.1} parent=1 // pred_check_branch
      %98 = sbr.rel (0) target = $region53
    $region52: #{tpu_custom_call.1} parent=1 // pred_region
      %s100 = ssub.s32 64, 64
      %101 = vsyncadd [#allocation12], %s100
      %s103 = sshll.u32 [#allocation11], 4
      %s104 = int_to_ptr.vmem [resolvable:$true] %s103
      %106 = dma.hbm_to_vmem [thread:$0]  %s12, 64, %s104, [#allocation12]
    $region53: #{tpu_custom_call.1} parent=1 // pred_fallthru
      _
    // Predicated region
    $region54: #{tpu_custom_call.1} parent=1 // pred_check
      _
    $region55: #{tpu_custom_call.1} parent=1 // pred_check_branch
      %108 = sbr.rel (0) target = $region57
    $region56: #{tpu_custom_call.1} parent=1 // pred_region
      _
    $region57: #{tpu_custom_call.1} parent=1 // pred_fallthru
      _
    // Predicated region
    $region58: #{tpu_custom_call.1} parent=1 // pred_check
      _
    $region59: #{tpu_custom_call.1} parent=1 // pred_check_branch
      %110 = sbr.rel (0) target = $region61
    $region60: #{tpu_custom_call.1} parent=1 // pred_region
      %s112 = ssub.s32 640, 640
      %113 = vsyncadd [#allocation12], %s112
      %s114 = sshll.u32 [#allocation13], 4
      %s115 = int_to_ptr.vmem [resolvable:$true] %s114
      %120 = dma.hbm_to_vmem [thread:$0]  %s14, 640, %s115, [#allocation12], 128, 128, 8
    $region61: #{tpu_custom_call.1} parent=1 // pred_fallthru
      _
    // Predicated region
    $region62: #{tpu_custom_call.1} parent=1 // pred_check
      _
    $region63: #{tpu_custom_call.1} parent=1 // pred_check_branch
      %122 = sbr.rel (0) target = $region65
    $region64: #{tpu_custom_call.1} parent=1 // pred_region
      %s124 = ssub.s32 16, 16
      %125 = vsyncadd [#allocation15], %s124
      %s127 = sshll.u32 [#allocation14], 4
      %s128 = int_to_ptr.vmem [resolvable:$true] %s127
      %130 = dma.hbm_to_vmem [thread:$0]  %s15, 16, %s128, [#allocation15]
    $region65: #{tpu_custom_call.1} parent=1 // pred_fallthru
      _
    // Predicated region
    $region66: #{tpu_custom_call.1} parent=1 // pred_check
      _
    $region67: #{tpu_custom_call.1} parent=1 // pred_check_branch
      %132 = sbr.rel (0) target = $region69
    $region68: #{tpu_custom_call.1} parent=1 // pred_region
      _
    $region69: #{tpu_custom_call.1} parent=1 // pred_fallthru
      _
    // Predicated region
    $region70: #{tpu_custom_call.1} parent=1 // pred_check
      _
    $region71: #{tpu_custom_call.1} parent=1 // pred_check_branch
      %134 = sbr.rel (0) target = $region73
    $region72: #{tpu_custom_call.1} parent=1 // pred_region
      _
    $region73: #{tpu_custom_call.1} parent=1 // pred_fallthru
      _
    // Predicated region
    $region74: #{tpu_custom_call.1} parent=1 // pred_check
      _
    $region75: #{tpu_custom_call.1} parent=1 // pred_check_branch
      %136 = sbr.rel (0) target = $region77
    $region76: #{tpu_custom_call.1} parent=1 // pred_region
      _
    $region77: #{tpu_custom_call.1} parent=1 // pred_fallthru
      _
    // Predicated region
    $region78: #{tpu_custom_call.1} parent=1 // pred_check
      _
    $region79: #{tpu_custom_call.1} parent=1 // pred_check_branch
      %138 = sbr.rel (0) target = $region81
    $region80: #{tpu_custom_call.1} parent=1 // pred_region
      _
    $region81: #{tpu_custom_call.1} parent=1 // pred_fallthru
      _
    // Predicated region
    $region82: #{tpu_custom_call.1} parent=1 // pred_check
      _
    $region83: #{tpu_custom_call.1} parent=1 // pred_check_branch
      %140 = sbr.rel (0) target = $region85
    $region84: #{tpu_custom_call.1} parent=1 // pred_region
      _
    $region85: #{tpu_custom_call.1} parent=1 // pred_fallthru
      _
    // Predicated region
    $region86: #{tpu_custom_call.1} parent=1 // pred_check
      _
    $region87: #{tpu_custom_call.1} parent=1 // pred_check_branch
      %142 = sbr.rel (0) target = $region89
    $region88: #{tpu_custom_call.1} parent=1 // pred_region
      _
    $region89: #{tpu_custom_call.1} parent=1 // pred_fallthru
      _
    // Predicated region
    $region90: #{tpu_custom_call.1} parent=1 // pred_check
      _
    $region91: #{tpu_custom_call.1} parent=1 // pred_check_branch
      %144 = sbr.rel (0) target = $region93
    $region92: #{tpu_custom_call.1} parent=1 // pred_region
      %145 = dma.done [#allocation3], 128
    $region93: #{tpu_custom_call.1} parent=1 // pred_fallthru
      _
    // Predicated region
    $region94: #{tpu_custom_call.1} parent=1 // pred_check
      _
    $region95: #{tpu_custom_call.1} parent=1 // pred_check_branch
      %147 = sbr.rel (0) target = $region97
    $region96: #{tpu_custom_call.1} parent=1 // pred_region
      %148 = dma.done [#allocation6], 128
    $region97: #{tpu_custom_call.1} parent=1 // pred_fallthru
      _
    // Predicated region
    $region98: #{tpu_custom_call.1} parent=1 // pred_check
      _
    $region99: #{tpu_custom_call.1} parent=1 // pred_check_branch
      %150 = sbr.rel (0) target = $region101
    $region100: #{tpu_custom_call.1} parent=1 // pred_region
      %151 = dma.done [#allocation6], 16
    $region101: #{tpu_custom_call.1} parent=1 // pred_fallthru
      _
    // Predicated region
    $region102: #{tpu_custom_call.1} parent=1 // pred_check
      _
    $region103: #{tpu_custom_call.1} parent=1 // pred_check_branch
      %153 = sbr.rel (0) target = $region105
    $region104: #{tpu_custom_call.1} parent=1 // pred_region
      %154 = dma.done [#allocation9], 16
    $region105: #{tpu_custom_call.1} parent=1 // pred_fallthru
      _
    // Predicated region
    $region106: #{tpu_custom_call.1} parent=1 // pred_check
      _
    $region107: #{tpu_custom_call.1} parent=1 // pred_check_branch
      %156 = sbr.rel (0) target = $region109
    $region108: #{tpu_custom_call.1} parent=1 // pred_region
      %157 = dma.done [#allocation9], 128
    $region109: #{tpu_custom_call.1} parent=1 // pred_fallthru
      _
    // Predicated region
    $region110: #{tpu_custom_call.1} parent=1 // pred_check
      _
    $region111: #{tpu_custom_call.1} parent=1 // pred_check_branch
      %159 = sbr.rel (0) target = $region113
    $region112: #{tpu_custom_call.1} parent=1 // pred_region
      %160 = dma.done [#allocation12], 64
    $region113: #{tpu_custom_call.1} parent=1 // pred_fallthru
      _
    // Predicated region
    $region114: #{tpu_custom_call.1} parent=1 // pred_check
      _
    $region115: #{tpu_custom_call.1} parent=1 // pred_check_branch
      %162 = sbr.rel (0) target = $region117
    $region116: #{tpu_custom_call.1} parent=1 // pred_region
      %163 = dma.done [#allocation12], 640
    $region117: #{tpu_custom_call.1} parent=1 // pred_fallthru
      _
    // Predicated region
    $region118: #{tpu_custom_call.1} parent=1 // pred_check
      _
    $region119: #{tpu_custom_call.1} parent=1 // pred_check_branch
      %165 = sbr.rel (0) target = $region121
    $region120: #{tpu_custom_call.1} parent=1 // pred_region
      %166 = dma.done [#allocation15], 16
    $region121: #{tpu_custom_call.1} parent=1 // pred_fallthru
      _
    %v167 = vld [vmem:[#allocation2] sm:$0xff]
    %v168 = vld [vmem:[%s1] sm:$0xff]
    %v169 = vld [vmem:[%s1 + $0x8] sm:$0xff]
    %v170 = vld [vmem:[%s1 + $0x10] sm:$0xff]
    %v171 = vld [vmem:[%s1 + $0x18] sm:$0xff]
    %v172 = vld [vmem:[#allocation5] sm:$0xff]
    %v173 = vld [vmem:[%s4] sm:$0xff]
    %v174 = vld [vmem:[%s4 + $0x8] sm:$0xff]
    %v175 = vld [vmem:[%s4 + $0x10] sm:$0xff]
    %v176 = vld [vmem:[%s4 + $0x18] sm:$0xff]
    %v177 = vld [vmem:[%s4 + $0x20] sm:$0xff]
    %v178 = vld [vmem:[%s6] sm:$0x1]
    %v180 = vlaneseq
    %v181 = vshrl.u32 %v180, 7
    %v182 = vsub.s32 0, %v181
    %v183 = vrot.slane %v178, %v182
    %vm185 = vcmask 326656
    %v187 = vsel %vm185, %v172, 0
    %189 = vmatprep.subr.mxu0 0.0
    %190 = vmatpush1.msra.mxu0 0.0
    %191 = vmatprep.subr.mxu0 0.0
    %192 = vmatpush1.msra.mxu0 0.0
    %193 = vmatprep.subr.mxu0 0.0
    %194 = vmatpush1.msra.mxu0 0.0
    %195 = vmatprep.subr.mxu0 0.0
    %196 = vmatpush1.msra.mxu0 0.0
    %197 = vmatprep.subr.mxu0 0.0
    %198 = vmatpush1.msra.mxu0 0.0
    %199 = vmatprep.subr.mxu0 0.0
    %200 = vmatpush1.msra.mxu0 0.0
    %201 = vmatprep.subr.mxu0 0.0
    %202 = vmatpush1.msra.mxu0 0.0
    %203 = vmatprep.subr.mxu0 0.0
    %204 = vmatpush1.msra.mxu0 0.0
    %205 = vmatprep.subr.mxu0 0.0
    %206 = vmatpush1.msra.mxu0 0.0
    %207 = vmatprep.subr.mxu0 0.0
    %208 = vmatpush1.msra.mxu0 0.0
    %209 = vmatprep.subr.mxu0 0.0
    %210 = vmatpush1.msra.mxu0 0.0
    %211 = vmatprep.subr.mxu0 0.0
    %212 = vmatpush1.msra.mxu0 %v177
    %213 = vmatprep.subr.mxu0 0.0
    %214 = vmatpush1.msra.mxu0 %v176
    %215 = vmatprep.subr.mxu0 0.0
    %216 = vmatpush1.msra.mxu0 %v175
    %217 = vmatprep.subr.mxu0 0.0
    %218 = vmatpush1.msra.mxu0 %v174
    %219 = vmatprep.subr.mxu0 0.0
    %220 = vmatpush1.msra.mxu0 %v173
    %221 = vmatprep.subr.mxu0 0.0
    %222 = vmatpush2.msra.mxu0 0.0
    %223 = vmatprep.subr.mxu0 0.0
    %224 = vmatpush2.msra.mxu0 0.0
    %225 = vmatprep.subr.mxu0 0.0
    %226 = vmatpush2.msra.mxu0 0.0
    %227 = vmatprep.subr.mxu0 0.0
    %228 = vmatpush2.msra.mxu0 0.0
    %229 = vmatprep.subr.mxu0 0.0
    %230 = vmatpush2.msra.mxu0 0.0
    %231 = vmatprep.subr.mxu0 0.0
    %232 = vmatpush2.msra.mxu0 0.0
    %233 = vmatprep.subr.mxu0 0.0
    %234 = vmatpush2.msra.mxu0 0.0
    %235 = vmatprep.subr.mxu0 0.0
    %236 = vmatpush2.msra.mxu0 0.0
    %237 = vmatprep.subr.mxu0 0.0
    %238 = vmatpush2.msra.mxu0 0.0
    %239 = vmatprep.subr.mxu0 0.0
    %240 = vmatpush2.msra.mxu0 0.0
    %241 = vmatprep.subr.mxu0 0.0
    %242 = vmatpush2.msra.mxu0 0.0
    %243 = vmatprep.subr.mxu0 0.0
    %244 = vmatpush2.msra.mxu0 0.0
    %245 = vmatprep.subr.mxu0 0.0
    %246 = vmatpush2.msra.mxu0 0.0
    %247 = vmatprep.subr.mxu0 0.0
    %248 = vmatpush2.msra.mxu0 0.0
    %249 = vmatprep.subr.mxu0 0.0
    %250 = vmatpush2.msra.mxu0 0.0
    %251 = vmatprep.subr.mxu0 0.0
    %252 = vmatpush2.msra.mxu0 0.0
    %253 = vmatprep.mubr.f32.mxu0 0.0
    %254 = vmatmul.mubr.f32.gmra.mxu0 %v187
    %v255 = vpop.f32.mrf.mxu0
    %v256 = vadd.f32 %v183, %v255
    %v257 = vpop.f32.mrf.mxu0
    %258 = vdwg.mxu0
    %v259 = vld [vmem:[%s3] sm:$0xf]
    %v260 = vld [vmem:[%s5] sm:$0xff]
    %v261 = vld [vmem:[%s5 + $0x8] sm:$0xff]
    %v262 = vld [vmem:[%s5 + $0x10] sm:$0xff]
    %v263 = vld [vmem:[%s5 + $0x18] sm:$0xff]
    %v264 = vld [vmem:[%s5 + $0x20] sm:$0xff]
    %v266 = vsel %vm185, %v259, 0
    %268 = vmatprep.subr.mxu0 0.0
    %269 = vmatpush1.msra.mxu0 0.0
    %270 = vmatprep.subr.mxu0 0.0
    %271 = vmatpush1.msra.mxu0 0.0
    %272 = vmatprep.subr.mxu0 0.0
    %273 = vmatpush1.msra.mxu0 0.0
    %274 = vmatprep.subr.mxu0 0.0
    %275 = vmatpush1.msra.mxu0 0.0
    %276 = vmatprep.subr.mxu0 0.0
    %277 = vmatpush1.msra.mxu0 0.0
    %278 = vmatprep.subr.mxu0 0.0
    %279 = vmatpush1.msra.mxu0 0.0
    %280 = vmatprep.subr.mxu0 0.0
    %281 = vmatpush1.msra.mxu0 0.0
    %282 = vmatprep.subr.mxu0 0.0
    %283 = vmatpush1.msra.mxu0 0.0
    %284 = vmatprep.subr.mxu0 0.0
    %285 = vmatpush1.msra.mxu0 0.0
    %286 = vmatprep.subr.mxu0 0.0
    %287 = vmatpush1.msra.mxu0 0.0
    %288 = vmatprep.subr.mxu0 0.0
    %289 = vmatpush1.msra.mxu0 0.0
    %290 = vmatprep.subr.mxu0 0.0
    %291 = vmatpush1.msra.mxu0 %v264
    %292 = vmatprep.subr.mxu0 0.0
    %293 = vmatpush1.msra.mxu0 %v263
    %294 = vmatprep.subr.mxu0 0.0
    %295 = vmatpush1.msra.mxu0 %v262
    %296 = vmatprep.subr.mxu0 0.0
    %297 = vmatpush1.msra.mxu0 %v261
    %298 = vmatprep.subr.mxu0 0.0
    %299 = vmatpush1.msra.mxu0 %v260
    %300 = vmatprep.subr.mxu0 0.0
    %301 = vmatpush2.msra.mxu0 0.0
    %302 = vmatprep.subr.mxu0 0.0
    %303 = vmatpush2.msra.mxu0 0.0
    %304 = vmatprep.subr.mxu0 0.0
    %305 = vmatpush2.msra.mxu0 0.0
    %306 = vmatprep.subr.mxu0 0.0
    %307 = vmatpush2.msra.mxu0 0.0
    %308 = vmatprep.subr.mxu0 0.0
    %309 = vmatpush2.msra.mxu0 0.0
    %310 = vmatprep.subr.mxu0 0.0
    %311 = vmatpush2.msra.mxu0 0.0
    %312 = vmatprep.subr.mxu0 0.0
    %313 = vmatpush2.msra.mxu0 0.0
    %314 = vmatprep.subr.mxu0 0.0
    %315 = vmatpush2.msra.mxu0 0.0
    %316 = vmatprep.subr.mxu0 0.0
    %317 = vmatpush2.msra.mxu0 0.0
    %318 = vmatprep.subr.mxu0 0.0
    %319 = vmatpush2.msra.mxu0 0.0
    %320 = vmatprep.subr.mxu0 0.0
    %321 = vmatpush2.msra.mxu0 0.0
    %322 = vmatprep.subr.mxu0 0.0
    %323 = vmatpush2.msra.mxu0 0.0
    %324 = vmatprep.subr.mxu0 0.0
    %325 = vmatpush2.msra.mxu0 0.0
    %326 = vmatprep.subr.mxu0 0.0
    %327 = vmatpush2.msra.mxu0 0.0
    %328 = vmatprep.subr.mxu0 0.0
    %329 = vmatpush2.msra.mxu0 0.0
    %330 = vmatprep.subr.mxu0 0.0
    %331 = vmatpush2.msra.mxu0 0.0
    %332 = vmatprep.mubr.f32.mxu0 0.0
    %333 = vmatmul.mubr.f32.gmra.mxu0 %v266
    %v334 = vpop.f32.mrf.mxu0
    %v335 = vadd.f32 0.0, %v334
    %v336 = vpop.f32.mrf.mxu0
    %337 = vdwg.mxu0
    %vm338 = vcmask 31744
    %v340 = vsel %vm338, %v168, 0
    %v343 = vsel %vm338, %v169, 0
    %v346 = vsel %vm338, %v170, 0
    %v349 = vsel %vm338, %v171, 0
    %vm351 = vcmask 1043456
    %v353 = vsel %vm351, %v335, 0
    %355 = vmatprep.subr.mxu0 0.0
    %356 = vmatpush1.msra.mxu0 0.0
    %357 = vmatprep.subr.mxu0 0.0
    %358 = vmatpush1.msra.mxu0 0.0
    %359 = vmatprep.subr.mxu0 0.0
    %360 = vmatpush1.msra.mxu0 0.0
    %361 = vmatprep.subr.mxu0 0.0
    %362 = vmatpush1.msra.mxu0 0.0
    %363 = vmatprep.subr.mxu0 0.0
    %364 = vmatpush1.msra.mxu0 0.0
    %365 = vmatprep.subr.mxu0 0.0
    %366 = vmatpush1.msra.mxu0 0.0
    %367 = vmatprep.subr.mxu0 0.0
    %368 = vmatpush1.msra.mxu0 0.0
    %369 = vmatprep.subr.mxu0 0.0
    %370 = vmatpush1.msra.mxu0 0.0
    %371 = vmatprep.subr.mxu0 0.0
    %372 = vmatpush1.msra.mxu0 0.0
    %373 = vmatprep.subr.mxu0 0.0
    %374 = vmatpush1.msra.mxu0 0.0
    %375 = vmatprep.subr.mxu0 0.0
    %376 = vmatpush1.msra.mxu0 0.0
    %377 = vmatprep.subr.mxu0 0.0
    %378 = vmatpush1.msra.mxu0 0.0
    %379 = vmatprep.subr.mxu0 0.0
    %380 = vmatpush1.msra.mxu0 0.0
    %381 = vmatprep.subr.mxu0 0.0
    %382 = vmatpush1.msra.mxu0 0.0
    %383 = vmatprep.subr.mxu0 0.0
    %384 = vmatpush1.msra.mxu0 0.0
    %385 = vmatprep.subr.mxu0 0.0
    %386 = vmatpush1.msra.mxu0 %v353
    %387 = vmatprep.subr.mxu0 0.0
    %388 = vmatpush2.msra.mxu0 0.0
    %389 = vmatprep.subr.mxu0 0.0
    %390 = vmatpush2.msra.mxu0 0.0
    %391 = vmatprep.subr.mxu0 0.0
    %392 = vmatpush2.msra.mxu0 0.0
    %393 = vmatprep.subr.mxu0 0.0
    %394 = vmatpush2.msra.mxu0 0.0
    %395 = vmatprep.subr.mxu0 0.0
    %396 = vmatpush2.msra.mxu0 0.0
    %397 = vmatprep.subr.mxu0 0.0
    %398 = vmatpush2.msra.mxu0 0.0
    %399 = vmatprep.subr.mxu0 0.0
    %400 = vmatpush2.msra.mxu0 0.0
    %401 = vmatprep.subr.mxu0 0.0
    %402 = vmatpush2.msra.mxu0 0.0
    %403 = vmatprep.subr.mxu0 0.0
    %404 = vmatpush2.msra.mxu0 0.0
    %405 = vmatprep.subr.mxu0 0.0
    %406 = vmatpush2.msra.mxu0 0.0
    %407 = vmatprep.subr.mxu0 0.0
    %408 = vmatpush2.msra.mxu0 0.0
    %409 = vmatprep.subr.mxu0 0.0
    %410 = vmatpush2.msra.mxu0 0.0
    %411 = vmatprep.subr.mxu0 0.0
    %412 = vmatpush2.msra.mxu0 0.0
    %413 = vmatprep.subr.mxu0 0.0
    %414 = vmatpush2.msra.mxu0 0.0
    %415 = vmatprep.subr.mxu0 0.0
    %416 = vmatpush2.msra.mxu0 0.0
    %417 = vmatprep.subr.mxu0 0.0
    %418 = vmatpush2.msra.mxu0 0.0
    %419 = vmatprep.mubr.f32.mxu0 0.0
    %420 = vmatmul.mubr.f32.gmra.mxu0 %v340
    %v421 = vpop.f32.mrf.mxu0
    %v422 = vadd.f32 0.0, %v421
    %v423 = vpop.f32.mrf.mxu0
    %424 = vmatprep.mubr.f32.mxu0 0.0
    %425 = vmatmul.mubr.f32.gmra.mxu0 %v343
    %v426 = vpop.f32.mrf.mxu0
    %v427 = vadd.f32 0.0, %v426
    %v428 = vpop.f32.mrf.mxu0
    %429 = vmatprep.mubr.f32.mxu0 0.0
    %430 = vmatmul.mubr.f32.gmra.mxu0 %v346
    %v431 = vpop.f32.mrf.mxu0
    %v432 = vadd.f32 0.0, %v431
    %v433 = vpop.f32.mrf.mxu0
    %434 = vmatprep.mubr.f32.mxu0 0.0
    %435 = vmatmul.mubr.f32.gmra.mxu0 %v349
    %v436 = vpop.f32.mrf.mxu0
    %v437 = vadd.f32 0.0, %v436
    %v438 = vpop.f32.mrf.mxu0
    %439 = vdwg.mxu0
    %v440 = vadd.f32 %v422, %v256
    %vm441 = vcmask 523264
    %v442 = vsel %vm441, %v440, 0.0
    %v443 = vrot.slane %v442, 4
    %v444 = vadd.f32 %v442, %v443
    %v445 = vrot.slane %v444, 2
    %v446 = vadd.f32 %v444, %v445
    %v447 = vrot.slane %v446, 1
    %v448 = vadd.f32 %v446, %v447
    %v449 = vadd.f32 %v448, 0.0
    %v450 = vadd.f32 %v427, %v256
    %v451 = vsel %vm441, %v450, 0.0
    %v452 = vrot.slane %v451, 4
    %v453 = vadd.f32 %v451, %v452
    %v454 = vrot.slane %v453, 2
    %v455 = vadd.f32 %v453, %v454
    %v456 = vrot.slane %v455, 1
    %v457 = vadd.f32 %v455, %v456
    %v458 = vadd.f32 %v449, %v457
    %v459 = vadd.f32 %v432, %v256
    %v460 = vsel %vm441, %v459, 0.0
    %v461 = vrot.slane %v460, 4
    %v462 = vadd.f32 %v460, %v461
    %v463 = vrot.slane %v462, 2
    %v464 = vadd.f32 %v462, %v463
    %v465 = vrot.slane %v464, 1
    %v466 = vadd.f32 %v464, %v465
    %v467 = vadd.f32 %v458, %v466
    %v468 = vadd.f32 %v437, %v256
    %v469 = vsel %vm441, %v468, 0.0
    %v470 = vrot.slane %v469, 4
    %v471 = vadd.f32 %v469, %v470
    %v472 = vrot.slane %v471, 2
    %v473 = vadd.f32 %v471, %v472
    %v474 = vrot.slane %v473, 1
    %v475 = vadd.f32 %v473, %v474
    %v476 = vadd.f32 %v467, %v475
    %v477 = vrcp.pop 32.0
    %v478 = vmul.f32 %v476, %v477
    %v479 = vsub.f32 %v440, %v478
    %v480 = vmul.f32 %v479, %v479
    %v481 = vsel %vm441, %v480, 0.0
    %v482 = vrot.slane %v481, 4
    %v483 = vadd.f32 %v481, %v482
    %v484 = vrot.slane %v483, 2
    %v485 = vadd.f32 %v483, %v484
    %v486 = vrot.slane %v485, 1
    %v487 = vadd.f32 %v485, %v486
    %v488 = vadd.f32 %v487, 0.0
    %v489 = vsub.f32 %v450, %v478
    %v490 = vmul.f32 %v489, %v489
    %v491 = vsel %vm441, %v490, 0.0
    %v492 = vrot.slane %v491, 4
    %v493 = vadd.f32 %v491, %v492
    %v494 = vrot.slane %v493, 2
    %v495 = vadd.f32 %v493, %v494
    %v496 = vrot.slane %v495, 1
    %v497 = vadd.f32 %v495, %v496
    %v498 = vadd.f32 %v488, %v497
    %v499 = vsub.f32 %v459, %v478
    %v500 = vmul.f32 %v499, %v499
    %v501 = vsel %vm441, %v500, 0.0
    %v502 = vrot.slane %v501, 4
    %v503 = vadd.f32 %v501, %v502
    %v504 = vrot.slane %v503, 2
    %v505 = vadd.f32 %v503, %v504
    %v506 = vrot.slane %v505, 1
    %v507 = vadd.f32 %v505, %v506
    %v508 = vadd.f32 %v498, %v507
    %v509 = vsub.f32 %v468, %v478
    %v510 = vmul.f32 %v509, %v509
    %v511 = vsel %vm441, %v510, 0.0
    %v512 = vrot.slane %v511, 4
    %v513 = vadd.f32 %v511, %v512
    %v514 = vrot.slane %v513, 2
    %v515 = vadd.f32 %v513, %v514
    %v516 = vrot.slane %v515, 1
    %v517 = vadd.f32 %v515, %v516
    %v518 = vadd.f32 %v508, %v517
    %v519 = vmul.f32 %v518, %v477
    %v520 = vadd.f32 %v519, 1e-05
    %v521 = vrsqrt.pop %v520
    %v522 = vld [vmem:[%s7] sm:$0x1]
    %v523 = vmul.f32 %v521, %v522
    %v524 = vld [vmem:[%s8] sm:$0x1]
    %v525 = vmul.f32 %v478, %v523
    %v526 = vsub.f32 %v524, %v525
    %v527 = vlaneseq
    %v528 = vshrl.u32 %v527, 7
    %v529 = vsub.s32 0, %v528
    %v530 = vrot.slane %v523, %v529
    %v531 = vmul.f32 %v440, %v530
    %v533 = vlaneseq
    %v534 = vshrl.u32 %v533, 7
    %v535 = vsub.s32 0, %v534
    %v536 = vrot.slane %v526, %v535
    %v538 = vadd.f32 %v531, %v536
    %v539 = vmax.f32 %v538, 0.0
    %vm540 = vcmask 261120
    %v541 = vsel %vm540, %v539, -inf
    %542 = vmax.xlane.f32.xlu0 %v541
    %v543 = vpop.xlane.xlu0 %542
    %v544 = vsub.f32 %v539, %v543
    %v545 = vmul.f32 %v544, 1.442695
    %v546 = vpow.pop %v545
    %v547 = vsel %vm540, %v546, 0.0
    %548 = vadd.xlane.f32.xlu0 %v547
    %v549 = vpop.xlane.xlu0 %548
    %v550 = vrcp.pop %v549
    %v551 = vmul.f32 %v546, %v550
    %v552 = vmax.f32 %v539, 0.0
    %v553 = vand.u32 2147483647, %v539
    %v554 = vsub.f32 0.0, %v553
    %v555 = vmul.f32 %v554, 1.442695
    %v556 = vpow.pop %v555
    %v557 = vadd.f32 %v556, 1.0
    %v558 = vlog2.pop %v557
    %v559 = vmul.f32 %v558, 0.6931472
    %v560 = vmul.f32 -0.5, %v556
    %v561 = vadd.f32 %v560, 1.0
    %v562 = vmul.f32 %v561, %v556
    %v563 = vand.u32 2147483647, %v556
    %vm564 = vcmp.lt.f32.partialorder %v563, 0.0004427343
    %v565 = vsel %vm564, %v562, %v559
    %v566 = vadd.f32 %v552, %v565
    %568 = vrot.lane.b32.xlu0 %v566, 96
    %v569 = vpop.permute.xlu0 %568
    %v571 = vmul.f32 %v551, %v569
    %v572 = vadd.f32 %v571, 0.0
    %v573 = vmul.f32 %v450, %v530
    %v574 = vadd.f32 %v573, %v536
    %v575 = vmax.f32 %v574, 0.0
    %v576 = vsel %vm540, %v575, -inf
    %577 = vmax.xlane.f32.xlu0 %v576
    %v578 = vpop.xlane.xlu0 %577
    %v579 = vsub.f32 %v575, %v578
    %v580 = vmul.f32 %v579, 1.442695
    %v581 = vpow.pop %v580
    %v582 = vsel %vm540, %v581, 0.0
    %583 = vadd.xlane.f32.xlu0 %v582
    %v584 = vpop.xlane.xlu0 %583
    %v585 = vrcp.pop %v584
    %v586 = vmul.f32 %v581, %v585
    %v587 = vmax.f32 %v575, 0.0
    %v588 = vand.u32 2147483647, %v575
    %v589 = vsub.f32 0.0, %v588
    %v590 = vmul.f32 %v589, 1.442695
    %v591 = vpow.pop %v590
    %v592 = vadd.f32 %v591, 1.0
    %v593 = vlog2.pop %v592
    %v594 = vmul.f32 %v593, 0.6931472
    %v595 = vmul.f32 -0.5, %v591
    %v596 = vadd.f32 %v595, 1.0
    %v597 = vmul.f32 %v596, %v591
    %v598 = vand.u32 2147483647, %v591
    %vm599 = vcmp.lt.f32.partialorder %v598, 0.0004427343
    %v600 = vsel %vm599, %v597, %v594
    %v601 = vadd.f32 %v587, %v600
    %603 = vrot.lane.b32.xlu0 %v601, 96
    %v604 = vpop.permute.xlu0 %603
    %v606 = vmul.f32 %v586, %v604
    %v607 = vadd.f32 %v572, %v606
    %v608 = vmul.f32 %v459, %v530
    %v609 = vadd.f32 %v608, %v536
    %v610 = vmax.f32 %v609, 0.0
    %v611 = vsel %vm540, %v610, -inf
    %612 = vmax.xlane.f32.xlu0 %v611
    %v613 = vpop.xlane.xlu0 %612
    %v614 = vsub.f32 %v610, %v613
    %v615 = vmul.f32 %v614, 1.442695
    %v616 = vpow.pop %v615
    %v617 = vsel %vm540, %v616, 0.0
    %618 = vadd.xlane.f32.xlu0 %v617
    %v619 = vpop.xlane.xlu0 %618
    %v620 = vrcp.pop %v619
    %v621 = vmul.f32 %v616, %v620
    %v622 = vmax.f32 %v610, 0.0
    %v623 = vand.u32 2147483647, %v610
    %v624 = vsub.f32 0.0, %v623
    %v625 = vmul.f32 %v624, 1.442695
    %v626 = vpow.pop %v625
    %v627 = vadd.f32 %v626, 1.0
    %v628 = vlog2.pop %v627
    %v629 = vmul.f32 %v628, 0.6931472
    %v630 = vmul.f32 -0.5, %v626
    %v631 = vadd.f32 %v630, 1.0
    %v632 = vmul.f32 %v631, %v626
    %v633 = vand.u32 2147483647, %v626
    %vm634 = vcmp.lt.f32.partialorder %v633, 0.0004427343
    %v635 = vsel %vm634, %v632, %v629
    %v636 = vadd.f32 %v622, %v635
    %638 = vrot.lane.b32.xlu0 %v636, 96
    %v639 = vpop.permute.xlu0 %638
    %v641 = vmul.f32 %v621, %v639
    %v642 = vadd.f32 %v607, %v641
    %v643 = vmul.f32 %v468, %v530
    %v644 = vadd.f32 %v643, %v536
    %v645 = vmax.f32 %v644, 0.0
    %v646 = vsel %vm540, %v645, -inf
    %647 = vmax.xlane.f32.xlu0 %v646
    %v648 = vpop.xlane.xlu0 %647
    %v649 = vsub.f32 %v645, %v648
    %v650 = vmul.f32 %v649, 1.442695
    %v651 = vpow.pop %v650
    %v652 = vsel %vm540, %v651, 0.0
    %653 = vadd.xlane.f32.xlu0 %v652
    %v654 = vpop.xlane.xlu0 %653
    %v655 = vrcp.pop %v654
    %v656 = vmul.f32 %v651, %v655
    %v657 = vmax.f32 %v645, 0.0
    %v658 = vand.u32 2147483647, %v645
    %v659 = vsub.f32 0.0, %v658
    %v660 = vmul.f32 %v659, 1.442695
    %v661 = vpow.pop %v660
    %v662 = vadd.f32 %v661, 1.0
    %v663 = vlog2.pop %v662
    %v664 = vmul.f32 %v663, 0.6931472
    %v665 = vmul.f32 -0.5, %v661
    %v666 = vadd.f32 %v665, 1.0
    %v667 = vmul.f32 %v666, %v661
    %v668 = vand.u32 2147483647, %v661
    %vm669 = vcmp.lt.f32.partialorder %v668, 0.0004427343
    %v670 = vsel %vm669, %v667, %v664
    %v671 = vadd.f32 %v657, %v670
    %673 = vrot.lane.b32.xlu0 %v671, 96
    %v674 = vpop.permute.xlu0 %673
    %v676 = vmul.f32 %v656, %v674
    %v677 = vadd.f32 %v642, %v676
    %v678 = vsel %vm540, %v677, 0.0
    %v679 = vrot.slane %v678, 4
    %v680 = vadd.f32 %v678, %v679
    %v681 = vrot.slane %v680, 2
    %v682 = vadd.f32 %v680, %v681
    %v683 = vrot.slane %v682, 1
    %v684 = vadd.f32 %v682, %v683
    %v685 = vrcp.pop 8.0
    %v686 = vmul.f32 %v684, %v685
    %v687 = vsub.f32 %v677, %v686
    %v688 = vmul.f32 %v687, %v687
    %v689 = vsel %vm540, %v688, 0.0
    %v690 = vrot.slane %v689, 4
    %v691 = vadd.f32 %v689, %v690
    %v692 = vrot.slane %v691, 2
    %v693 = vadd.f32 %v691, %v692
    %v694 = vrot.slane %v693, 1
    %v695 = vadd.f32 %v693, %v694
    %v696 = vmul.f32 %v695, %v685
    %v697 = vadd.f32 %v696, 1e-05
    %v698 = vrsqrt.pop %v697
    %v699 = vmul.f32 %v687, %v698
    %v700 = vld [vmem:[#allocation7] sm:$0x1]
    %v702 = vlaneseq
    %v703 = vshrl.u32 %v702, 7
    %v704 = vsub.s32 0, %v703
    %v705 = vrot.slane %v700, %v704
    %v707 = vmul.f32 %v699, %v705
    %v708 = vld [vmem:[#allocation8] sm:$0x1]
    %v710 = vlaneseq
    %v711 = vshrl.u32 %v710, 7
    %v712 = vsub.s32 0, %v711
    %v713 = vrot.slane %v708, %v712
    %v715 = vadd.f32 %v707, %v713
    %v716 = vadd.f32 %v715, %v167
    %v717 = vmax.f32 %v716, 0.0
    %v718 = vld [vmem:[#allocation10] sm:$0xff]
    %v719 = vld [vmem:[%s13] sm:$0xff]
    %v720 = vld [vmem:[%s13 + $0x8] sm:$0xff]
    %v721 = vld [vmem:[%s13 + $0x10] sm:$0xff]
    %v722 = vld [vmem:[%s13 + $0x18] sm:$0xff]
    %v723 = vld [vmem:[%s13 + $0x20] sm:$0xff]
    %v724 = vld [vmem:[#allocation14] sm:$0x1]
    %v726 = vlaneseq
    %v727 = vshrl.u32 %v726, 7
    %v728 = vsub.s32 0, %v727
    %v729 = vrot.slane %v724, %v728
    %v732 = vsel %vm185, %v718, 0
    %734 = vmatprep.subr.mxu0 0.0
    %735 = vmatpush1.msra.mxu0 0.0
    %736 = vmatprep.subr.mxu0 0.0
    %737 = vmatpush1.msra.mxu0 0.0
    %738 = vmatprep.subr.mxu0 0.0
    %739 = vmatpush1.msra.mxu0 0.0
    %740 = vmatprep.subr.mxu0 0.0
    %741 = vmatpush1.msra.mxu0 0.0
    %742 = vmatprep.subr.mxu0 0.0
    %743 = vmatpush1.msra.mxu0 0.0
    %744 = vmatprep.subr.mxu0 0.0
    %745 = vmatpush1.msra.mxu0 0.0
    %746 = vmatprep.subr.mxu0 0.0
    %747 = vmatpush1.msra.mxu0 0.0
    %748 = vmatprep.subr.mxu0 0.0
    %749 = vmatpush1.msra.mxu0 0.0
    %750 = vmatprep.subr.mxu0 0.0
    %751 = vmatpush1.msra.mxu0 0.0
    %752 = vmatprep.subr.mxu0 0.0
    %753 = vmatpush1.msra.mxu0 0.0
    %754 = vmatprep.subr.mxu0 0.0
    %755 = vmatpush1.msra.mxu0 0.0
    %756 = vmatprep.subr.mxu0 0.0
    %757 = vmatpush1.msra.mxu0 %v723
    %758 = vmatprep.subr.mxu0 0.0
    %759 = vmatpush1.msra.mxu0 %v722
    %760 = vmatprep.subr.mxu0 0.0
    %761 = vmatpush1.msra.mxu0 %v721
    %762 = vmatprep.subr.mxu0 0.0
    %763 = vmatpush1.msra.mxu0 %v720
    %764 = vmatprep.subr.mxu0 0.0
    %765 = vmatpush1.msra.mxu0 %v719
    %766 = vmatprep.subr.mxu0 0.0
    %767 = vmatpush2.msra.mxu0 0.0
    %768 = vmatprep.subr.mxu0 0.0
    %769 = vmatpush2.msra.mxu0 0.0
    %770 = vmatprep.subr.mxu0 0.0
    %771 = vmatpush2.msra.mxu0 0.0
    %772 = vmatprep.subr.mxu0 0.0
    %773 = vmatpush2.msra.mxu0 0.0
    %774 = vmatprep.subr.mxu0 0.0
    %775 = vmatpush2.msra.mxu0 0.0
    %776 = vmatprep.subr.mxu0 0.0
    %777 = vmatpush2.msra.mxu0 0.0
    %778 = vmatprep.subr.mxu0 0.0
    %779 = vmatpush2.msra.mxu0 0.0
    %780 = vmatprep.subr.mxu0 0.0
    %781 = vmatpush2.msra.mxu0 0.0
    %782 = vmatprep.subr.mxu0 0.0
    %783 = vmatpush2.msra.mxu0 0.0
    %784 = vmatprep.subr.mxu0 0.0
    %785 = vmatpush2.msra.mxu0 0.0
    %786 = vmatprep.subr.mxu0 0.0
    %787 = vmatpush2.msra.mxu0 0.0
    %788 = vmatprep.subr.mxu0 0.0
    %789 = vmatpush2.msra.mxu0 0.0
    %790 = vmatprep.subr.mxu0 0.0
    %791 = vmatpush2.msra.mxu0 0.0
    %792 = vmatprep.subr.mxu0 0.0
    %793 = vmatpush2.msra.mxu0 0.0
    %794 = vmatprep.subr.mxu0 0.0
    %795 = vmatpush2.msra.mxu0 0.0
    %796 = vmatprep.subr.mxu0 0.0
    %797 = vmatpush2.msra.mxu0 0.0
    %798 = vmatprep.mubr.f32.mxu0 0.0
    %799 = vmatmul.mubr.f32.gmra.mxu0 %v732
    %v800 = vpop.f32.mrf.mxu0
    %v801 = vadd.f32 %v729, %v800
    %v802 = vpop.f32.mrf.mxu0
    %803 = vdwg.mxu0
    %v804 = vld [vmem:[#allocation11] sm:$0xf]
    %v805 = vld [vmem:[#allocation13] sm:$0xff]
    %v806 = vld [vmem:[#allocation13 + $0x8] sm:$0xff]
    %v807 = vld [vmem:[#allocation13 + $0x10] sm:$0xff]
    %v808 = vld [vmem:[#allocation13 + $0x18] sm:$0xff]
    %v809 = vld [vmem:[#allocation13 + $0x20] sm:$0xff]
    %v811 = vsel %vm185, %v804, 0
    %813 = vmatprep.subr.mxu0 0.0
    %814 = vmatpush1.msra.mxu0 0.0
    %815 = vmatprep.subr.mxu0 0.0
    %816 = vmatpush1.msra.mxu0 0.0
    %817 = vmatprep.subr.mxu0 0.0
    %818 = vmatpush1.msra.mxu0 0.0
    %819 = vmatprep.subr.mxu0 0.0
    %820 = vmatpush1.msra.mxu0 0.0
    %821 = vmatprep.subr.mxu0 0.0
    %822 = vmatpush1.msra.mxu0 0.0
    %823 = vmatprep.subr.mxu0 0.0
    %824 = vmatpush1.msra.mxu0 0.0
    %825 = vmatprep.subr.mxu0 0.0
    %826 = vmatpush1.msra.mxu0 0.0
    %827 = vmatprep.subr.mxu0 0.0
    %828 = vmatpush1.msra.mxu0 0.0
    %829 = vmatprep.subr.mxu0 0.0
    %830 = vmatpush1.msra.mxu0 0.0
    %831 = vmatprep.subr.mxu0 0.0
    %832 = vmatpush1.msra.mxu0 0.0
    %833 = vmatprep.subr.mxu0 0.0
    %834 = vmatpush1.msra.mxu0 0.0
    %835 = vmatprep.subr.mxu0 0.0
    %836 = vmatpush1.msra.mxu0 %v809
    %837 = vmatprep.subr.mxu0 0.0
    %838 = vmatpush1.msra.mxu0 %v808
    %839 = vmatprep.subr.mxu0 0.0
    %840 = vmatpush1.msra.mxu0 %v807
    %841 = vmatprep.subr.mxu0 0.0
    %842 = vmatpush1.msra.mxu0 %v806
    %843 = vmatprep.subr.mxu0 0.0
    %844 = vmatpush1.msra.mxu0 %v805
    %845 = vmatprep.subr.mxu0 0.0
    %846 = vmatpush2.msra.mxu0 0.0
    %847 = vmatprep.subr.mxu0 0.0
    %848 = vmatpush2.msra.mxu0 0.0
    %849 = vmatprep.subr.mxu0 0.0
    %850 = vmatpush2.msra.mxu0 0.0
    %851 = vmatprep.subr.mxu0 0.0
    %852 = vmatpush2.msra.mxu0 0.0
    %853 = vmatprep.subr.mxu0 0.0
    %854 = vmatpush2.msra.mxu0 0.0
    %855 = vmatprep.subr.mxu0 0.0
    %856 = vmatpush2.msra.mxu0 0.0
    %857 = vmatprep.subr.mxu0 0.0
    %858 = vmatpush2.msra.mxu0 0.0
    %859 = vmatprep.subr.mxu0 0.0
    %860 = vmatpush2.msra.mxu0 0.0
    %861 = vmatprep.subr.mxu0 0.0
    %862 = vmatpush2.msra.mxu0 0.0
    %863 = vmatprep.subr.mxu0 0.0
    %864 = vmatpush2.msra.mxu0 0.0
    %865 = vmatprep.subr.mxu0 0.0
    %866 = vmatpush2.msra.mxu0 0.0
    %867 = vmatprep.subr.mxu0 0.0
    %868 = vmatpush2.msra.mxu0 0.0
    %869 = vmatprep.subr.mxu0 0.0
    %870 = vmatpush2.msra.mxu0 0.0
    %871 = vmatprep.subr.mxu0 0.0
    %872 = vmatpush2.msra.mxu0 0.0
    %873 = vmatprep.subr.mxu0 0.0
    %874 = vmatpush2.msra.mxu0 0.0
    %875 = vmatprep.subr.mxu0 0.0
    %876 = vmatpush2.msra.mxu0 0.0
    %877 = vmatprep.mubr.f32.mxu0 0.0
    %878 = vmatmul.mubr.f32.gmra.mxu0 %v811
    %v879 = vpop.f32.mrf.mxu0
    %v880 = vadd.f32 0.0, %v879
    %v881 = vpop.f32.mrf.mxu0
    %882 = vdwg.mxu0
    %v884 = vsel %vm351, %v880, 0
    %886 = vmatprep.subr.mxu0 0.0
    %887 = vmatpush1.msra.mxu0 0.0
    %888 = vmatprep.subr.mxu0 0.0
    %889 = vmatpush1.msra.mxu0 0.0
    %890 = vmatprep.subr.mxu0 0.0
    %891 = vmatpush1.msra.mxu0 0.0
    %892 = vmatprep.subr.mxu0 0.0
    %893 = vmatpush1.msra.mxu0 0.0
    %894 = vmatprep.subr.mxu0 0.0
    %895 = vmatpush1.msra.mxu0 0.0
    %896 = vmatprep.subr.mxu0 0.0
    %897 = vmatpush1.msra.mxu0 0.0
    %898 = vmatprep.subr.mxu0 0.0
    %899 = vmatpush1.msra.mxu0 0.0
    %900 = vmatprep.subr.mxu0 0.0
    %901 = vmatpush1.msra.mxu0 0.0
    %902 = vmatprep.subr.mxu0 0.0
    %903 = vmatpush1.msra.mxu0 0.0
    %904 = vmatprep.subr.mxu0 0.0
    %905 = vmatpush1.msra.mxu0 0.0
    %906 = vmatprep.subr.mxu0 0.0
    %907 = vmatpush1.msra.mxu0 0.0
    %908 = vmatprep.subr.mxu0 0.0
    %909 = vmatpush1.msra.mxu0 0.0
    %910 = vmatprep.subr.mxu0 0.0
    %911 = vmatpush1.msra.mxu0 0.0
    %912 = vmatprep.subr.mxu0 0.0
    %913 = vmatpush1.msra.mxu0 0.0
    %914 = vmatprep.subr.mxu0 0.0
    %915 = vmatpush1.msra.mxu0 0.0
    %916 = vmatprep.subr.mxu0 0.0
    %917 = vmatpush1.msra.mxu0 %v884
    %918 = vmatprep.subr.mxu0 0.0
    %919 = vmatpush2.msra.mxu0 0.0
    %920 = vmatprep.subr.mxu0 0.0
    %921 = vmatpush2.msra.mxu0 0.0
    %922 = vmatprep.subr.mxu0 0.0
    %923 = vmatpush2.msra.mxu0 0.0
    %924 = vmatprep.subr.mxu0 0.0
    %925 = vmatpush2.msra.mxu0 0.0
    %926 = vmatprep.subr.mxu0 0.0
    %927 = vmatpush2.msra.mxu0 0.0
    %928 = vmatprep.subr.mxu0 0.0
    %929 = vmatpush2.msra.mxu0 0.0
    %930 = vmatprep.subr.mxu0 0.0
    %931 = vmatpush2.msra.mxu0 0.0
    %932 = vmatprep.subr.mxu0 0.0
    %933 = vmatpush2.msra.mxu0 0.0
    %934 = vmatprep.subr.mxu0 0.0
    %935 = vmatpush2.msra.mxu0 0.0
    %936 = vmatprep.subr.mxu0 0.0
    %937 = vmatpush2.msra.mxu0 0.0
    %938 = vmatprep.subr.mxu0 0.0
    %939 = vmatpush2.msra.mxu0 0.0
    %940 = vmatprep.subr.mxu0 0.0
    %941 = vmatpush2.msra.mxu0 0.0
    %942 = vmatprep.subr.mxu0 0.0
    %943 = vmatpush2.msra.mxu0 0.0
    %944 = vmatprep.subr.mxu0 0.0
    %945 = vmatpush2.msra.mxu0 0.0
    %946 = vmatprep.subr.mxu0 0.0
    %947 = vmatpush2.msra.mxu0 0.0
    %948 = vmatprep.subr.mxu0 0.0
    %949 = vmatpush2.msra.mxu0 0.0
    %950 = vmatprep.mubr.f32.mxu0 0.0
    %951 = vmatmul.mubr.f32.gmra.mxu0 %v340
    %v952 = vpop.f32.mrf.mxu0
    %v953 = vadd.f32 0.0, %v952
    %v954 = vpop.f32.mrf.mxu0
    %955 = vmatprep.mubr.f32.mxu0 0.0
    %956 = vmatmul.mubr.f32.gmra.mxu0 %v343
    %v957 = vpop.f32.mrf.mxu0
    %v958 = vadd.f32 0.0, %v957
    %v959 = vpop.f32.mrf.mxu0
    %960 = vmatprep.mubr.f32.mxu0 0.0
    %961 = vmatmul.mubr.f32.gmra.mxu0 %v346
    %v962 = vpop.f32.mrf.mxu0
    %v963 = vadd.f32 0.0, %v962
    %v964 = vpop.f32.mrf.mxu0
    %965 = vmatprep.mubr.f32.mxu0 0.0
    %966 = vmatmul.mubr.f32.gmra.mxu0 %v349
    %v967 = vpop.f32.mrf.mxu0
    %v968 = vadd.f32 0.0, %v967
    %v969 = vpop.f32.mrf.mxu0
    %970 = vdwg.mxu0
    %v971 = vadd.f32 %v953, %v801
    %v972 = vsel %vm441, %v971, 0.0
    %v973 = vrot.slane %v972, 4
    %v974 = vadd.f32 %v972, %v973
    %v975 = vrot.slane %v974, 2
    %v976 = vadd.f32 %v974, %v975
    %v977 = vrot.slane %v976, 1
    %v978 = vadd.f32 %v976, %v977
    %v979 = vadd.f32 %v978, 0.0
    %v980 = vadd.f32 %v958, %v801
    %v981 = vsel %vm441, %v980, 0.0
    %v982 = vrot.slane %v981, 4
    %v983 = vadd.f32 %v981, %v982
    %v984 = vrot.slane %v983, 2
    %v985 = vadd.f32 %v983, %v984
    %v986 = vrot.slane %v985, 1
    %v987 = vadd.f32 %v985, %v986
    %v988 = vadd.f32 %v979, %v987
    %v989 = vadd.f32 %v963, %v801
    %v990 = vsel %vm441, %v989, 0.0
    %v991 = vrot.slane %v990, 4
    %v992 = vadd.f32 %v990, %v991
    %v993 = vrot.slane %v992, 2
    %v994 = vadd.f32 %v992, %v993
    %v995 = vrot.slane %v994, 1
    %v996 = vadd.f32 %v994, %v995
    %v997 = vadd.f32 %v988, %v996
    %v998 = vadd.f32 %v968, %v801
    %v999 = vsel %vm441, %v998, 0.0
    %v1000 = vrot.slane %v999, 4
    %v1001 = vadd.f32 %v999, %v1000
    %v1002 = vrot.slane %v1001, 2
    %v1003 = vadd.f32 %v1001, %v1002
    %v1004 = vrot.slane %v1003, 1
    %v1005 = vadd.f32 %v1003, %v1004
    %v1006 = vadd.f32 %v997, %v1005
    %v1007 = vmul.f32 %v1006, %v477
    %v1008 = vsub.f32 %v971, %v1007
    %v1009 = vmul.f32 %v1008, %v1008
    %v1010 = vsel %vm441, %v1009, 0.0
    %v1011 = vrot.slane %v1010, 4
    %v1012 = vadd.f32 %v1010, %v1011
    %v1013 = vrot.slane %v1012, 2
    %v1014 = vadd.f32 %v1012, %v1013
    %v1015 = vrot.slane %v1014, 1
    %v1016 = vadd.f32 %v1014, %v1015
    %v1017 = vadd.f32 %v1016, 0.0
    %v1018 = vsub.f32 %v980, %v1007
    %v1019 = vmul.f32 %v1018, %v1018
    %v1020 = vsel %vm441, %v1019, 0.0
    %v1021 = vrot.slane %v1020, 4
    %v1022 = vadd.f32 %v1020, %v1021
    %v1023 = vrot.slane %v1022, 2
    %v1024 = vadd.f32 %v1022, %v1023
    %v1025 = vrot.slane %v1024, 1
    %v1026 = vadd.f32 %v1024, %v1025
    %v1027 = vadd.f32 %v1017, %v1026
    %v1028 = vsub.f32 %v989, %v1007
    %v1029 = vmul.f32 %v1028, %v1028
    %v1030 = vsel %vm441, %v1029, 0.0
    %v1031 = vrot.slane %v1030, 4
    %v1032 = vadd.f32 %v1030, %v1031
    %v1033 = vrot.slane %v1032, 2
    %v1034 = vadd.f32 %v1032, %v1033
    %v1035 = vrot.slane %v1034, 1
    %v1036 = vadd.f32 %v1034, %v1035
    %v1037 = vadd.f32 %v1027, %v1036
    %v1038 = vsub.f32 %v998, %v1007
    %v1039 = vmul.f32 %v1038, %v1038
    %v1040 = vsel %vm441, %v1039, 0.0
    %v1041 = vrot.slane %v1040, 4
    %v1042 = vadd.f32 %v1040, %v1041
    %v1043 = vrot.slane %v1042, 2
    %v1044 = vadd.f32 %v1042, %v1043
    %v1045 = vrot.slane %v1044, 1
    %v1046 = vadd.f32 %v1044, %v1045
    %v1047 = vadd.f32 %v1037, %v1046
    %v1048 = vmul.f32 %v1047, %v477
    %v1049 = vadd.f32 %v1048, 1e-05
    %v1050 = vrsqrt.pop %v1049
    %v1051 = vld [vmem:[%s16] sm:$0x1]
    %v1052 = vmul.f32 %v1050, %v1051
    %v1053 = vld [vmem:[%s17] sm:$0x1]
    %v1054 = vmul.f32 %v1007, %v1052
    %v1055 = vsub.f32 %v1053, %v1054
    %v1056 = vlaneseq
    %v1057 = vshrl.u32 %v1056, 7
    %v1058 = vsub.s32 0, %v1057
    %v1059 = vrot.slane %v1052, %v1058
    %v1060 = vmul.f32 %v971, %v1059
    %v1062 = vlaneseq
    %v1063 = vshrl.u32 %v1062, 7
    %v1064 = vsub.s32 0, %v1063
    %v1065 = vrot.slane %v1055, %v1064
    %v1067 = vadd.f32 %v1060, %v1065
    %v1068 = vmax.f32 %v1067, 0.0
    %v1069 = vsel %vm540, %v1068, -inf
    %1070 = vmax.xlane.f32.xlu0 %v1069
    %v1071 = vpop.xlane.xlu0 %1070
    %v1072 = vsub.f32 %v1068, %v1071
    %v1073 = vmul.f32 %v1072, 1.442695
    %v1074 = vpow.pop %v1073
    %v1075 = vsel %vm540, %v1074, 0.0
    %1076 = vadd.xlane.f32.xlu0 %v1075
    %v1077 = vpop.xlane.xlu0 %1076
    %v1078 = vrcp.pop %v1077
    %v1079 = vmul.f32 %v1074, %v1078
    %v1080 = vmax.f32 %v1068, 0.0
    %v1081 = vand.u32 2147483647, %v1068
    %v1082 = vsub.f32 0.0, %v1081
    %v1083 = vmul.f32 %v1082, 1.442695
    %v1084 = vpow.pop %v1083
    %v1085 = vadd.f32 %v1084, 1.0
    %v1086 = vlog2.pop %v1085
    %v1087 = vmul.f32 %v1086, 0.6931472
    %v1088 = vmul.f32 -0.5, %v1084
    %v1089 = vadd.f32 %v1088, 1.0
    %v1090 = vmul.f32 %v1089, %v1084
    %v1091 = vand.u32 2147483647, %v1084
    %vm1092 = vcmp.lt.f32.partialorder %v1091, 0.0004427343
    %v1093 = vsel %vm1092, %v1090, %v1087
    %v1094 = vadd.f32 %v1080, %v1093
    %1096 = vrot.lane.b32.xlu0 %v1094, 96
    %v1097 = vpop.permute.xlu0 %1096
    %v1099 = vmul.f32 %v1079, %v1097
    %v1100 = vadd.f32 %v1099, 0.0
    %v1101 = vmul.f32 %v980, %v1059
    %v1102 = vadd.f32 %v1101, %v1065
    %v1103 = vmax.f32 %v1102, 0.0
    %v1104 = vsel %vm540, %v1103, -inf
    %1105 = vmax.xlane.f32.xlu0 %v1104
    %v1106 = vpop.xlane.xlu0 %1105
    %v1107 = vsub.f32 %v1103, %v1106
    %v1108 = vmul.f32 %v1107, 1.442695
    %v1109 = vpow.pop %v1108
    %v1110 = vsel %vm540, %v1109, 0.0
    %1111 = vadd.xlane.f32.xlu0 %v1110
    %v1112 = vpop.xlane.xlu0 %1111
    %v1113 = vrcp.pop %v1112
    %v1114 = vmul.f32 %v1109, %v1113
    %v1115 = vmax.f32 %v1103, 0.0
    %v1116 = vand.u32 2147483647, %v1103
    %v1117 = vsub.f32 0.0, %v1116
    %v1118 = vmul.f32 %v1117, 1.442695
    %v1119 = vpow.pop %v1118
    %v1120 = vadd.f32 %v1119, 1.0
    %v1121 = vlog2.pop %v1120
    %v1122 = vmul.f32 %v1121, 0.6931472
    %v1123 = vmul.f32 -0.5, %v1119
    %v1124 = vadd.f32 %v1123, 1.0
    %v1125 = vmul.f32 %v1124, %v1119
    %v1126 = vand.u32 2147483647, %v1119
    %vm1127 = vcmp.lt.f32.partialorder %v1126, 0.0004427343
    %v1128 = vsel %vm1127, %v1125, %v1122
    %v1129 = vadd.f32 %v1115, %v1128
    %1131 = vrot.lane.b32.xlu0 %v1129, 96
    %v1132 = vpop.permute.xlu0 %1131
    %v1134 = vmul.f32 %v1114, %v1132
    %v1135 = vadd.f32 %v1100, %v1134
    %v1136 = vmul.f32 %v989, %v1059
    %v1137 = vadd.f32 %v1136, %v1065
    %v1138 = vmax.f32 %v1137, 0.0
    %v1139 = vsel %vm540, %v1138, -inf
    %1140 = vmax.xlane.f32.xlu0 %v1139
    %v1141 = vpop.xlane.xlu0 %1140
    %v1142 = vsub.f32 %v1138, %v1141
    %v1143 = vmul.f32 %v1142, 1.442695
    %v1144 = vpow.pop %v1143
    %v1145 = vsel %vm540, %v1144, 0.0
    %1146 = vadd.xlane.f32.xlu0 %v1145
    %v1147 = vpop.xlane.xlu0 %1146
    %v1148 = vrcp.pop %v1147
    %v1149 = vmul.f32 %v1144, %v1148
    %v1150 = vmax.f32 %v1138, 0.0
    %v1151 = vand.u32 2147483647, %v1138
    %v1152 = vsub.f32 0.0, %v1151
    %v1153 = vmul.f32 %v1152, 1.442695
    %v1154 = vpow.pop %v1153
    %v1155 = vadd.f32 %v1154, 1.0
    %v1156 = vlog2.pop %v1155
    %v1157 = vmul.f32 %v1156, 0.6931472
    %v1158 = vmul.f32 -0.5, %v1154
    %v1159 = vadd.f32 %v1158, 1.0
    %v1160 = vmul.f32 %v1159, %v1154
    %v1161 = vand.u32 2147483647, %v1154
    %vm1162 = vcmp.lt.f32.partialorder %v1161, 0.0004427343
    %v1163 = vsel %vm1162, %v1160, %v1157
    %v1164 = vadd.f32 %v1150, %v1163
    %1166 = vrot.lane.b32.xlu0 %v1164, 96
    %v1167 = vpop.permute.xlu0 %1166
    %v1169 = vmul.f32 %v1149, %v1167
    %v1170 = vadd.f32 %v1135, %v1169
    %v1171 = vmul.f32 %v998, %v1059
    %v1172 = vadd.f32 %v1171, %v1065
    %v1173 = vmax.f32 %v1172, 0.0
    %v1174 = vsel %vm540, %v1173, -inf
    %1175 = vmax.xlane.f32.xlu0 %v1174
    %v1176 = vpop.xlane.xlu0 %1175
    %v1177 = vsub.f32 %v1173, %v1176
    %v1178 = vmul.f32 %v1177, 1.442695
    %v1179 = vpow.pop %v1178
    %v1180 = vsel %vm540, %v1179, 0.0
    %1181 = vadd.xlane.f32.xlu0 %v1180
    %v1182 = vpop.xlane.xlu0 %1181
    %v1183 = vrcp.pop %v1182
    %v1184 = vmul.f32 %v1179, %v1183
    %v1185 = vmax.f32 %v1173, 0.0
    %v1186 = vand.u32 2147483647, %v1173
    %v1187 = vsub.f32 0.0, %v1186
    %v1188 = vmul.f32 %v1187, 1.442695
    %v1189 = vpow.pop %v1188
    %v1190 = vadd.f32 %v1189, 1.0
    %v1191 = vlog2.pop %v1190
    %v1192 = vmul.f32 %v1191, 0.6931472
    %v1193 = vmul.f32 -0.5, %v1189
    %v1194 = vadd.f32 %v1193, 1.0
    %v1195 = vmul.f32 %v1194, %v1189
    %v1196 = vand.u32 2147483647, %v1189
    %vm1197 = vcmp.lt.f32.partialorder %v1196, 0.0004427343
    %v1198 = vsel %vm1197, %v1195, %v1192
    %v1199 = vadd.f32 %v1185, %v1198
    %1201 = vrot.lane.b32.xlu0 %v1199, 96
    %v1202 = vpop.permute.xlu0 %1201
    %v1204 = vmul.f32 %v1184, %v1202
    %v1205 = vadd.f32 %v1170, %v1204
    %v1206 = vsel %vm540, %v1205, 0.0
    %v1207 = vrot.slane %v1206, 4
    %v1208 = vadd.f32 %v1206, %v1207
    %v1209 = vrot.slane %v1208, 2
    %v1210 = vadd.f32 %v1208, %v1209
    %v1211 = vrot.slane %v1210, 1
    %v1212 = vadd.f32 %v1210, %v1211
    %v1213 = vmul.f32 %v1212, %v685
    %v1214 = vsub.f32 %v1205, %v1213
    %v1215 = vmul.f32 %v1214, %v1214
    %v1216 = vsel %vm540, %v1215, 0.0
    %v1217 = vrot.slane %v1216, 4
    %v1218 = vadd.f32 %v1216, %v1217
    %v1219 = vrot.slane %v1218, 2
    %v1220 = vadd.f32 %v1218, %v1219
    %v1221 = vrot.slane %v1220, 1
    %v1222 = vadd.f32 %v1220, %v1221
    %v1223 = vmul.f32 %v1222, %v685
    %v1224 = vadd.f32 %v1223, 1e-05
    %v1225 = vrsqrt.pop %v1224
    %v1226 = vmul.f32 %v1214, %v1225
    %v1227 = vld [vmem:[%s18] sm:$0x1]
    %v1229 = vlaneseq
    %v1230 = vshrl.u32 %v1229, 7
    %v1231 = vsub.s32 0, %v1230
    %v1232 = vrot.slane %v1227, %v1231
    %v1234 = vmul.f32 %v1226, %v1232
    %v1235 = vld [vmem:[%s19] sm:$0x1]
    %v1237 = vlaneseq
    %v1238 = vshrl.u32 %v1237, 7
    %v1239 = vsub.s32 0, %v1238
    %v1240 = vrot.slane %v1235, %v1239
    %v1242 = vadd.f32 %v1234, %v1240
    %v1243 = vadd.f32 %v1242, %v167
    %v1244 = vmax.f32 %v1243, 0.0
    %v1245 = vld [vmem:[%s20] sm:$0xff]
    %v1246 = vld [vmem:[%s20 + $0x8] sm:$0xff]
    %v1247 = vld [vmem:[%s20 + $0x10] sm:$0xff]
    %v1248 = vld [vmem:[%s20 + $0x18] sm:$0xff]
    %v1249 = vld [vmem:[%s20 + $0x20] sm:$0xff]
    %v1250 = vld [vmem:[%s20 + $0x28] sm:$0xff]
    %v1251 = vld [vmem:[%s20 + $0x30] sm:$0xff]
    %v1252 = vld [vmem:[%s20 + $0x38] sm:$0xff]
    %v1254 = vsel %vm540, %v1244, 0
    %1256 = vmatprep.subr.mxu0 0.0
    %1257 = vmatpush1.msra.mxu0 0.0
    %1258 = vmatprep.subr.mxu0 0.0
    %1259 = vmatpush1.msra.mxu0 0.0
    %1260 = vmatprep.subr.mxu0 0.0
    %1261 = vmatpush1.msra.mxu0 0.0
    %1262 = vmatprep.subr.mxu0 0.0
    %1263 = vmatpush1.msra.mxu0 0.0
    %1264 = vmatprep.subr.mxu0 0.0
    %1265 = vmatpush1.msra.mxu0 0.0
    %1266 = vmatprep.subr.mxu0 0.0
    %1267 = vmatpush1.msra.mxu0 0.0
    %1268 = vmatprep.subr.mxu0 0.0
    %1269 = vmatpush1.msra.mxu0 0.0
    %1270 = vmatprep.subr.mxu0 0.0
    %1271 = vmatpush1.msra.mxu0 0.0
    %1272 = vmatprep.subr.mxu0 0.0
    %1273 = vmatpush1.msra.mxu0 0.0
    %1274 = vmatprep.subr.mxu0 0.0
    %1275 = vmatpush1.msra.mxu0 0.0
    %1276 = vmatprep.subr.mxu0 0.0
    %1277 = vmatpush1.msra.mxu0 0.0
    %1278 = vmatprep.subr.mxu0 0.0
    %1279 = vmatpush1.msra.mxu0 0.0
    %1280 = vmatprep.subr.mxu0 0.0
    %1281 = vmatpush1.msra.mxu0 %v1252
    %1282 = vmatprep.subr.mxu0 0.0
    %1283 = vmatpush1.msra.mxu0 %v1251
    %1284 = vmatprep.subr.mxu0 0.0
    %1285 = vmatpush1.msra.mxu0 %v1250
    %1286 = vmatprep.subr.mxu0 0.0
    %1287 = vmatpush1.msra.mxu0 %v1249
    %1288 = vmatprep.subr.mxu0 0.0
    %1289 = vmatpush2.msra.mxu0 0.0
    %1290 = vmatprep.subr.mxu0 0.0
    %1291 = vmatpush2.msra.mxu0 0.0
    %1292 = vmatprep.subr.mxu0 0.0
    %1293 = vmatpush2.msra.mxu0 0.0
    %1294 = vmatprep.subr.mxu0 0.0
    %1295 = vmatpush2.msra.mxu0 0.0
    %1296 = vmatprep.subr.mxu0 0.0
    %1297 = vmatpush2.msra.mxu0 0.0
    %1298 = vmatprep.subr.mxu0 0.0
    %1299 = vmatpush2.msra.mxu0 0.0
    %1300 = vmatprep.subr.mxu0 0.0
    %1301 = vmatpush2.msra.mxu0 0.0
    %1302 = vmatprep.subr.mxu0 0.0
    %1303 = vmatpush2.msra.mxu0 0.0
    %1304 = vmatprep.subr.mxu0 0.0
    %1305 = vmatpush2.msra.mxu0 0.0
    %1306 = vmatprep.subr.mxu0 0.0
    %1307 = vmatpush2.msra.mxu0 0.0
    %1308 = vmatprep.subr.mxu0 0.0
    %1309 = vmatpush2.msra.mxu0 0.0
    %1310 = vmatprep.subr.mxu0 0.0
    %1311 = vmatpush2.msra.mxu0 0.0
    %1312 = vmatprep.subr.mxu0 0.0
    %1313 = vmatpush2.msra.mxu0 0.0
    %1314 = vmatprep.subr.mxu0 0.0
    %1315 = vmatpush2.msra.mxu0 0.0
    %1316 = vmatprep.subr.mxu0 0.0
    %1317 = vmatpush2.msra.mxu0 0.0
    %1318 = vmatprep.subr.mxu0 0.0
    %1319 = vmatpush2.msra.mxu0 0.0
    %1320 = vmatprep.mubr.f32.mxu0 0.0
    %1321 = vmatmul.mubr.f32.gmra.mxu0 %v1254
    %v1322 = vpop.f32.mrf.mxu0
    %v1323 = vadd.f32 0.0, %v1322
    %v1324 = vpop.f32.mrf.mxu0
    %1325 = vdwg.mxu0
    %v1327 = vsel %vm540, %v717, 0
    %1329 = vmatprep.subr.mxu0 0.0
    %1330 = vmatpush1.msra.mxu0 0.0
    %1331 = vmatprep.subr.mxu0 0.0
    %1332 = vmatpush1.msra.mxu0 0.0
    %1333 = vmatprep.subr.mxu0 0.0
    %1334 = vmatpush1.msra.mxu0 0.0
    %1335 = vmatprep.subr.mxu0 0.0
    %1336 = vmatpush1.msra.mxu0 0.0
    %1337 = vmatprep.subr.mxu0 0.0
    %1338 = vmatpush1.msra.mxu0 0.0
    %1339 = vmatprep.subr.mxu0 0.0
    %1340 = vmatpush1.msra.mxu0 0.0
    %1341 = vmatprep.subr.mxu0 0.0
    %1342 = vmatpush1.msra.mxu0 0.0
    %1343 = vmatprep.subr.mxu0 0.0
    %1344 = vmatpush1.msra.mxu0 0.0
    %1345 = vmatprep.subr.mxu0 0.0
    %1346 = vmatpush1.msra.mxu0 0.0
    %1347 = vmatprep.subr.mxu0 0.0
    %1348 = vmatpush1.msra.mxu0 0.0
    %1349 = vmatprep.subr.mxu0 0.0
    %1350 = vmatpush1.msra.mxu0 0.0
    %1351 = vmatprep.subr.mxu0 0.0
    %1352 = vmatpush1.msra.mxu0 0.0
    %1353 = vmatprep.subr.mxu0 0.0
    %1354 = vmatpush1.msra.mxu0 %v1248
    %1355 = vmatprep.subr.mxu0 0.0
    %1356 = vmatpush1.msra.mxu0 %v1247
    %1357 = vmatprep.subr.mxu0 0.0
    %1358 = vmatpush1.msra.mxu0 %v1246
    %1359 = vmatprep.subr.mxu0 0.0
    %1360 = vmatpush1.msra.mxu0 %v1245
    %1361 = vmatprep.subr.mxu0 0.0
    %1362 = vmatpush2.msra.mxu0 0.0
    %1363 = vmatprep.subr.mxu0 0.0
    %1364 = vmatpush2.msra.mxu0 0.0
    %1365 = vmatprep.subr.mxu0 0.0
    %1366 = vmatpush2.msra.mxu0 0.0
    %1367 = vmatprep.subr.mxu0 0.0
    %1368 = vmatpush2.msra.mxu0 0.0
    %1369 = vmatprep.subr.mxu0 0.0
    %1370 = vmatpush2.msra.mxu0 0.0
    %1371 = vmatprep.subr.mxu0 0.0
    %1372 = vmatpush2.msra.mxu0 0.0
    %1373 = vmatprep.subr.mxu0 0.0
    %1374 = vmatpush2.msra.mxu0 0.0
    %1375 = vmatprep.subr.mxu0 0.0
    %1376 = vmatpush2.msra.mxu0 0.0
    %1377 = vmatprep.subr.mxu0 0.0
    %1378 = vmatpush2.msra.mxu0 0.0
    %1379 = vmatprep.subr.mxu0 0.0
    %1380 = vmatpush2.msra.mxu0 0.0
    %1381 = vmatprep.subr.mxu0 0.0
    %1382 = vmatpush2.msra.mxu0 0.0
    %1383 = vmatprep.subr.mxu0 0.0
    %1384 = vmatpush2.msra.mxu0 0.0
    %1385 = vmatprep.subr.mxu0 0.0
    %1386 = vmatpush2.msra.mxu0 0.0
    %1387 = vmatprep.subr.mxu0 0.0
    %1388 = vmatpush2.msra.mxu0 0.0
    %1389 = vmatprep.subr.mxu0 0.0
    %1390 = vmatpush2.msra.mxu0 0.0
    %1391 = vmatprep.subr.mxu0 0.0
    %1392 = vmatpush2.msra.mxu0 0.0
    %1393 = vmatprep.mubr.f32.mxu0 0.0
    %1394 = vmatmul.mubr.f32.gmra.mxu0 %v1327
    %v1395 = vpop.f32.mrf.mxu0
    %v1396 = vadd.f32 %v1323, %v1395
    %v1397 = vpop.f32.mrf.mxu0
    %1398 = vdwg.mxu0
    %v1399 = vld [vmem:[%s21] sm:$0x1]
    %v1401 = vlaneseq
    %v1402 = vshrl.u32 %v1401, 7
    %v1403 = vsub.s32 0, %v1402
    %v1404 = vrot.slane %v1399, %v1403
    %v1406 = vadd.f32 %v1396, %v1404
    %v1407 = vmax.f32 %v1406, 0.0
    %1408 = vst.msk [vmem:[#allocation16] sm:$0xff] %vm540, %v1407
    // Predicated region
    $region122: #{tpu_custom_call.1} parent=1 // pred_check
      _
    $region123: #{tpu_custom_call.1} parent=1 // pred_check_branch
      %1410 = sbr.rel (0) target = $region125
    $region124: #{tpu_custom_call.1} parent=1 // pred_region
      %s1412 = ssub.s32 128, 128
      %1413 = vsyncadd [#allocation4], %s1412
      %s1415 = sshll.u32 [#allocation16], 4
      %s1416 = int_to_ptr.vmem [resolvable:$true] %s1415
      %1418 = dma.vmem_to_hbm [thread:$0]  %s1416, 128, %s22, [#allocation4]
    $region125: #{tpu_custom_call.1} parent=1 // pred_fallthru
      _
    // Predicated region
    $region126: #{tpu_custom_call.1} parent=1 // pred_check
      _
    $region127: #{tpu_custom_call.1} parent=1 // pred_check_branch
      %1420 = sbr.rel (0) target = $region129
    $region128: #{tpu_custom_call.1} parent=1 // pred_region
      %1421 = dma.done [#allocation4], 128
    $region129: #{tpu_custom_call.1} parent=1 // pred_fallthru
      _
    %1422 = vsyncpa [#allocation3], 1
    %1423 = vsyncpa [#allocation6], 1
    %1424 = vsyncpa [#allocation9], 1
    %1425 = vsyncpa [#allocation12], 1
    %1426 = vsyncpa [#allocation15], 1
    %1427 = vsyncpa [#allocation4], 1

</llo_original>
